<compile_context>
chip_gen: v7x
topology: tpu7x:2x2x1
jax: 0.10.0
libtpu: 0.0.40
codegen_flags: <defaults>
</compile_context>

<pallas_src>
import jax
import jax.numpy as jnp
from jax.experimental import pallas as pl
from jax.experimental.pallas import tpu as pltpu


def _round_up(x, m):
    return (x + m - 1) // m * m


def _nbytes(a):
    return a.size * a.dtype.itemsize


def _vmem_capacity_bytes(default=64 << 20):
    """Physical VMEM per TensorCore; conservative fallback (v7x) if unknown."""
    try:
        cap = getattr(pltpu.get_tpu_info(), "vmem_capacity_bytes", None)
        if cap:
            return int(cap)
    except Exception:
        pass
    return default


def _pick_tile_v(vocab_size, d_model, w_bytes, budget_bytes, tv_max=8192, rows=16):
    """Largest lane-dense vocab tile whose double-buffered footprint fits budget."""
    v128 = _round_up(max(vocab_size, 1), 128)
    tv = min(_round_up(tv_max, 128), v128)

    def footprint(t):
        # double-buffered: weight tile + bias tile + logit tile
        return 2 * (d_model * t * w_bytes + t * 4 + rows * t * 4)

    while tv > 128 and footprint(tv) > budget_bytes:
        tv = max(_round_up(tv // 2, 128), 128)
    return max(tv, 128)


# ---------------------------------------------------------------------------
# Kernel 1: Bahdanau (Seq2Seq) attention + conditional GRU cell (one shot, f32)
# ---------------------------------------------------------------------------
def _attn_gru_kernel(
    embed_ref,      # [N, EMB]    f32  gathered word embeddings
    cond_ref,       # [N, 1]      f32  condition scalar c
    cond_w_ref,     # [2, EMB]    f32  condition embedding table
    h0_ref,         # [N, D]      f32  GRU hidden (attention query)
    attn_emb_ref,   # [N, Tp, E]  f32  encoder memory (T padded to mult of 8)
    attn_len_ref,   # [N, 1]      i32  valid encoder lengths
    wd_ref,         # [D, A]      f32  h2attn decoder half (transposed)
    we_ref,         # [E, A]      f32  h2attn encoder half (transposed)
    b_attn_ref,     # [1, A]      f32
    v_ref,          # [1, A]      f32
    w_ctx_ref,      # [E, EMB]    f32  ctx_proj (transposed)
    b_ctx_ref,      # [1, EMB]    f32
    wi_emb_ref,     # [EMB, 3*D]  f32  W_ih rows for word-embedding slice
    wi_ctx_ref,     # [EMB, 3*D]  f32  W_ih rows for projected-context slice
    wi_cond_ref,    # [EMB, 3*D]  f32  W_ih rows for condition-embedding slice
    w_h_ref,        # [D, 3*D]    f32  W_hh (transposed), cols ordered r|z|n
    b_i_ref,        # [1, 3*D]    f32
    b_h_ref,        # [1, 3*D]    f32
    # outputs
    h_out_ref,      # [N, D]      f32  new GRU hidden
    attnw_ref,      # [N, Tp]     f32  attention weights
):
    f32 = jnp.float32
    N, Tp, E = attn_emb_ref.shape
    D = h0_ref.shape[1]

    embed = embed_ref[...]                                             # [N, EMB]

    # condition "embedding": [1-c, c] @ condition_embedding.weight
    c = cond_ref[...]                                                  # [N, 1]
    cond_emb = (1.0 - c) * cond_w_ref[0:1, :] + c * cond_w_ref[1:2, :]  # [N, EMB]

    # ---- Bahdanau additive attention ----
    q = h0_ref[...]                                                    # [N, D]
    dec_proj = (jnp.dot(q, wd_ref[...], preferred_element_type=f32)
                + b_attn_ref[...])                                     # [N, A]
    enc_flat = attn_emb_ref[...].reshape(N * Tp, E)                    # free view (Tp % 8 == 0)
    enc_proj = jnp.dot(enc_flat, we_ref[...],
                       preferred_element_type=f32).reshape(N, Tp, -1)  # [N, Tp, A]
    attn_out = jnp.tanh(enc_proj + dec_proj[:, None, :])               # [N, Tp, A]
    score = jnp.sum(attn_out * v_ref[...][None, :, :], axis=-1)        # [N, Tp]

    idx = jax.lax.broadcasted_iota(jnp.int32, (N, Tp), 1)
    mask = idx < attn_len_ref[...]                                     # [N, Tp]
    score = jnp.where(mask, score, jnp.full_like(score, -1e10))

    score = score - jnp.max(score, axis=-1, keepdims=True)             # softmax (exact)
    exp_s = jnp.exp(score)
    weights = exp_s / jnp.sum(exp_s, axis=-1, keepdims=True)           # [N, Tp]
    attnw_ref[...] = weights

    # context = weights @ attn_emb  (batched contraction on the MXU)
    ctx = jnp.einsum('nqt,nte->nqe', weights[:, None, :], attn_emb_ref[...],
                     preferred_element_type=f32)[:, 0, :]              # [N, E]
    p_ctx = (jnp.dot(ctx, w_ctx_ref[...], preferred_element_type=f32)
             + b_ctx_ref[...])                                         # [N, EMB]

    # ---- GRU cell, one step; input-gate matmul split to avoid lane-axis concat
    gi = (jnp.dot(embed, wi_emb_ref[...], preferred_element_type=f32)
          + jnp.dot(p_ctx, wi_ctx_ref[...], preferred_element_type=f32)
          + jnp.dot(cond_emb, wi_cond_ref[...], preferred_element_type=f32)
          + b_i_ref[...])                                              # [N, 3*D]
    gh = jnp.dot(q, w_h_ref[...], preferred_element_type=f32) + b_h_ref[...]
    r = jax.nn.sigmoid(gi[:, 0:D] + gh[:, 0:D])
    z = jax.nn.sigmoid(gi[:, D:2 * D] + gh[:, D:2 * D])
    n = jnp.tanh(gi[:, 2 * D:3 * D] + r * gh[:, 2 * D:3 * D])
    h_out_ref[...] = (1.0 - z) * n + z * q                             # [N, D]


# ---------------------------------------------------------------------------
# Kernel 2: vocab-streaming classifier (pure weight stream, vocab-parallel)
# ---------------------------------------------------------------------------
def _classifier_kernel(h_ref, w_ref, b_ref, logit_ref):
    # h_ref: [N_pad, D] cdt ; w_ref: [D, TV] cdt ; b_ref: [1, TV] f32
    logit_ref[...] = (jnp.dot(h_ref[...], w_ref[...],
                              preferred_element_type=jnp.float32)
                      + b_ref[...])


# ---------------------------------------------------------------------------
# Parameter construction / one-time preparation
# ---------------------------------------------------------------------------
def init_params(key, vocab_size, emb_dim, attn_emb_dim, d_model, attn_size):
    """Deterministic synthetic parameters in the torch module's layout."""
    ks = jax.random.split(key, 13)

    def rnd(k, shape, scale=0.1):
        return (scale * jax.random.normal(k, shape)).astype(jnp.float32)

    return {
        'word_emb':   rnd(ks[0], (vocab_size, emb_dim)),             # Embedding(V, emb)
        'cond_emb':   rnd(ks[1], (2, emb_dim)),                      # Embedding(2, emb)
        # Seq2SeqAttention.h2attn: input is cat((h_dec, h_enc)) -> first d_model
        # columns are the decoder part, remaining attn_emb_dim the encoder part.
        'h2attn_w':   rnd(ks[2], (attn_size, d_model + attn_emb_dim)),
        'h2attn_b':   rnd(ks[3], (attn_size,)),
        'v':          rnd(ks[4], (attn_size,)),
        'ctx_proj_w': rnd(ks[5], (emb_dim, attn_emb_dim)),
        'ctx_proj_b': rnd(ks[6], (emb_dim,)),
        'gru_w_ih':   rnd(ks[7], (3 * d_model, 3 * emb_dim)),        # rows (r|z|n)
        'gru_w_hh':   rnd(ks[8], (3 * d_model, d_model)),
        'gru_b_ih':   rnd(ks[9], (3 * d_model,)),
        'gru_b_hh':   rnd(ks[10], (3 * d_model,)),
        'cls_w':      rnd(ks[11], (vocab_size, d_model)),
        'cls_b':      rnd(ks[12], (vocab_size,)),
    }


def prepare_params(params, *, tile_v_max=8192, vmem_budget_bytes=None,
                   compute_dtype=jnp.bfloat16):
    """One-time conversion of torch-layout params into kernel layout."""
    f32 = jnp.float32
    cdt = jnp.dtype(compute_dtype)
    vocab_size, d_model = params['cls_w'].shape
    _, emb_dim = params['word_emb'].shape
    attn_size = params['v'].shape[0]
    attn_emb_dim = params['ctx_proj_w'].shape[1]

    if vmem_budget_bytes is None:
        cap = _vmem_capacity_bytes()
        vmem_budget_bytes = min(40 << 20, max(cap - (24 << 20), 16 << 20))

    tv = _pick_tile_v(vocab_size, d_model, cdt.itemsize, vmem_budget_bytes,
                      tv_max=tile_v_max)
    v_pad = _round_up(vocab_size, tv)

    w_cls = jnp.transpose(params['cls_w']).astype(cdt)                 # [D, V]
    w_cls = jnp.pad(w_cls, ((0, 0), (0, v_pad - vocab_size)))
    b_cls = jnp.pad(params['cls_b'].astype(f32),
                    (0, v_pad - vocab_size)).reshape(1, v_pad)

    # GRU gates: W_ih is [3*D, 3*EMB]; transpose -> [3*EMB, 3*D], then split rows
    # into the (embed | projected-context | condition-embedding) input slices.
    w_i = jnp.transpose(params['gru_w_ih']).astype(f32)                # [3*EMB, 3*D]

    return {
        'compute_dtype': cdt,
        'dims': dict(vocab_size=vocab_size, v_pad=v_pad, tile_v=tv,
                     d_model=d_model, emb_dim=emb_dim,
                     attn_emb_dim=attn_emb_dim, attn_size=attn_size),
        'word_emb': params['word_emb'].astype(f32),                    # [V, EMB]
        'cond_w':   params['cond_emb'].astype(f32),                    # [2, EMB]
        'wd': jnp.transpose(params['h2attn_w'][:, :d_model]).astype(f32),   # [D, A]
        'we': jnp.transpose(params['h2attn_w'][:, d_model:]).astype(f32),   # [E, A]
        'b_attn': params['h2attn_b'].reshape(1, attn_size).astype(f32),
        'v':      params['v'].reshape(1, attn_size).astype(f32),
        'w_ctx':  jnp.transpose(params['ctx_proj_w']).astype(f32),     # [E, EMB]
        'b_ctx':  params['ctx_proj_b'].reshape(1, emb_dim).astype(f32),
        'wi_emb':  w_i[0 * emb_dim:1 * emb_dim],                       # [EMB, 3*D]
        'wi_ctx':  w_i[1 * emb_dim:2 * emb_dim],                       # [EMB, 3*D]
        'wi_cond': w_i[2 * emb_dim:3 * emb_dim],                       # [EMB, 3*D]
        'w_h': jnp.transpose(params['gru_w_hh']).astype(f32),          # [D, 3*D]
        'b_i': params['gru_b_ih'].reshape(1, 3 * d_model).astype(f32),
        'b_h': params['gru_b_hh'].reshape(1, 3 * d_model).astype(f32),
        'w_cls': w_cls,                                                # [D, V_pad] cdt
        'b_cls': b_cls,                                                # [1, V_pad] f32
    }


# ---------------------------------------------------------------------------
# One decoding step
# ---------------------------------------------------------------------------
def conditional_bah_attn_decoder(prepared, word, fc_emb, attn_emb, attn_emb_len,
                                 condition, state=None):
    """One decoding step (seq_len == 1). `fc_emb` kept for interface parity only."""
    del fc_emb
    f32 = jnp.float32
    cdt = prepared['compute_dtype']
    dims = prepared['dims']
    V, V_pad, TV, D = dims['vocab_size'], dims['v_pad'], dims['tile_v'], dims['d_model']

    N, T, _E = attn_emb.shape
    T_pad = _round_up(T, 8)

    if state is None:
        state = jnp.zeros((1, N, D), f32)            # init_hidden (GRU)
    # query = state.transpose(0, 1).flatten(1)   (num_layers=1, unidirectional)
    h0 = jnp.transpose(state, (1, 0, 2)).reshape(N, D).astype(f32)

    word_ids = jnp.asarray(word, jnp.int32).reshape(N)       # seq_len == 1
    embed = jnp.take(prepared['word_emb'], word_ids, axis=0)          # [N, EMB]
    cond = jnp.asarray(condition, f32).reshape(N, 1)
    lens = jnp.asarray(attn_emb_len, jnp.int32).reshape(N, 1)

    attn_emb_f = attn_emb.astype(f32)
    if T_pad != T:
        attn_emb_f = jnp.pad(attn_emb_f, ((0, 0), (0, T_pad - T), (0, 0)))

    # ----------------- call 1: attention + GRU (one shot) -----------------
    attn_inputs = [
        embed, cond, prepared['cond_w'], h0, attn_emb_f, lens,
        prepared['wd'], prepared['we'], prepared['b_attn'], prepared['v'],
        prepared['w_ctx'], prepared['b_ctx'],
        prepared['wi_emb'], prepared['wi_ctx'], prepared['wi_cond'],
        prepared['w_h'], prepared['b_i'], prepared['b_h'],
    ]

    def const_spec(shape):
        nd = len(shape)
        return pl.BlockSpec(shape, lambda i, _nd=nd: (0,) * _nd)

    attn_out_shape = (jax.ShapeDtypeStruct((N, D), f32),
                      jax.ShapeDtypeStruct((N, T_pad), f32))
    attn_bytes = (sum(_nbytes(a) for a in attn_inputs)
                  + N * D * 4 + N * T_pad * 4)
    attn_vmem = int(min(max(2 * attn_bytes + (8 << 20), 16 << 20), 48 << 20))

    h_new, attn_w = pl.pallas_call(
        _attn_gru_kernel,
        grid=(1,),
        in_specs=[const_spec(a.shape) for a in attn_inputs],
        out_specs=(const_spec((N, D)), const_spec((N, T_pad))),
        out_shape=attn_out_shape,
        compiler_params=pltpu.CompilerParams(
            dimension_semantics=("arbitrary",),
            vmem_limit_bytes=attn_vmem),
    )(*attn_inputs)

    # ----------------- call 2: vocab-streaming classifier -----------------
    N_pad = _round_up(N, 8)          # full-sublane rows; extra rows are ~free
    h_pad = h_new
    if N_pad != N:
        h_pad = jnp.pad(h_pad, ((0, N_pad - N), (0, 0)))
    h_pad = h_pad.astype(cdt)

    grid_v = V_pad // TV
    w_bytes = cdt.itemsize
    per_tile = D * TV * w_bytes + TV * 4 + N_pad * TV * 4
    resident = N_pad * D * w_bytes
    cls_vmem = int(min(max(2 * per_tile + 2 * resident + (4 << 20), 16 << 20),
                       48 << 20))
    cls_cost = pl.CostEstimate(
        flops=2 * N_pad * D * V_pad,
        transcendentals=0,
        bytes_accessed=int(D * V_pad * w_bytes + V_pad * 4
                           + N_pad * D * w_bytes + N_pad * V_pad * 4))

    logits_pad = pl.pallas_call(
        _classifier_kernel,
        grid=(grid_v,),
        in_specs=[pl.BlockSpec((N_pad, D), lambda j: (0, 0)),
                  pl.BlockSpec((D, TV), lambda j: (0, j)),
                  pl.BlockSpec((1, TV), lambda j: (0, j))],
        out_specs=pl.BlockSpec((N_pad, TV), lambda j: (0, j)),
        out_shape=jax.ShapeDtypeStruct((N_pad, V_pad), f32),
        compiler_params=pltpu.CompilerParams(
            # vocab axis is embarrassingly parallel after the split
            dimension_semantics=("parallel",),
            vmem_limit_bytes=cls_vmem),
        cost_estimate=cls_cost,
    )(h_pad, prepared['w_cls'], prepared['b_cls'])

    logit = logits_pad[:N, :V]
    attn_w = attn_w[:, :T]

    # TODO(synk): in_dropout is treated as identity (eval mode); training-mode
    # dropout would need pltpu.prng_* inside the kernel.
    return {
        'state': h_new[None, :, :],            # [1, N, D]   GRU hidden
        'embed': h_new[:, None, :],            # [N, 1, D]   GRU output (seq=1)
        'logit': logit[:, None, :],            # [N, 1, V]
        'attn_weight': attn_w,                 # [N, T]
    }


if __name__ == "__main__":
    N, T = 2, 8
    emb_dim = 32
    vocab_size = 128
    fc_emb_dim = 32
    attn_emb_dim = 32
    d_model = 32
    attn_size = d_model          # kwargs default: attn_size = d_model

    key = jax.random.PRNGKey(0)
    kp, kw, kf, ka = jax.random.split(key, 4)
    params = init_params(kp, vocab_size, emb_dim, attn_emb_dim, d_model, attn_size)
    prepared = prepare_params(params)     # one-time weight prep (hoisted out of the step)

    word = jax.random.randint(kw, (N, 1), 0, vocab_size, dtype=jnp.int32)
    fc_emb = jax.random.normal(kf, (N, fc_emb_dim), jnp.float32)
    attn_emb = jax.random.normal(ka, (N, T, attn_emb_dim), jnp.float32)
    attn_emb_len = jnp.array([T, T // 2], jnp.int32)
    condition = jnp.array([1.0, 0.0], jnp.float32)

    out = conditional_bah_attn_decoder(prepared, word, fc_emb, attn_emb,
                                       attn_emb_len, condition, state=None)
    jax.block_until_ready(out)
    print("KERNEL_OK")
</pallas_src>

<mosaic_0001>
module attributes {stable_mosaic.version = 11 : i64} {
  func.func @_attn_gru_kernel(%arg0: i32, %arg1: memref<2x32xf32, #tpu.memory_space<vmem>>, %arg2: memref<2x1xf32, #tpu.memory_space<vmem>>, %arg3: memref<2x32xf32, #tpu.memory_space<vmem>>, %arg4: memref<2x32xf32, #tpu.memory_space<vmem>>, %arg5: memref<2x8x32xf32, #tpu.memory_space<vmem>>, %arg6: memref<2x1xi32, #tpu.memory_space<vmem>>, %arg7: memref<32x32xf32, #tpu.memory_space<vmem>>, %arg8: memref<32x32xf32, #tpu.memory_space<vmem>>, %arg9: memref<1x32xf32, #tpu.memory_space<vmem>>, %arg10: memref<1x32xf32, #tpu.memory_space<vmem>>, %arg11: memref<32x32xf32, #tpu.memory_space<vmem>>, %arg12: memref<1x32xf32, #tpu.memory_space<vmem>>, %arg13: memref<32x96xf32, #tpu.memory_space<vmem>>, %arg14: memref<32x96xf32, #tpu.memory_space<vmem>>, %arg15: memref<32x96xf32, #tpu.memory_space<vmem>>, %arg16: memref<32x96xf32, #tpu.memory_space<vmem>>, %arg17: memref<1x96xf32, #tpu.memory_space<vmem>>, %arg18: memref<1x96xf32, #tpu.memory_space<vmem>>, %arg19: memref<2x32xf32, #tpu.memory_space<vmem>>, %arg20: memref<2x8xf32, #tpu.memory_space<vmem>>) attributes {dimension_semantics = [#tpu.dimension_semantics<arbitrary>], iteration_bounds = array<i64: 1>, scalar_prefetch = 0 : i64, scratch_operands = 0 : i64, tpu.core_type = #tpu.core_type<tc>, window_params = [{pipeline_mode = #tpu.pipeline_mode<synchronous>, transform_indices = @transform_0, window_bounds = array<i64: 2, 32>}, {pipeline_mode = #tpu.pipeline_mode<synchronous>, transform_indices = @transform_1, window_bounds = array<i64: 2, 1>}, {pipeline_mode = #tpu.pipeline_mode<synchronous>, transform_indices = @transform_2, window_bounds = array<i64: 2, 32>}, {pipeline_mode = #tpu.pipeline_mode<synchronous>, transform_indices = @transform_3, window_bounds = array<i64: 2, 32>}, {pipeline_mode = #tpu.pipeline_mode<synchronous>, transform_indices = @transform_4, window_bounds = array<i64: 2, 8, 32>}, {pipeline_mode = #tpu.pipeline_mode<synchronous>, transform_indices = @transform_5, window_bounds = array<i64: 2, 1>}, {pipeline_mode = #tpu.pipeline_mode<synchronous>, transform_indices = @transform_6, window_bounds = array<i64: 32, 32>}, {pipeline_mode = #tpu.pipeline_mode<synchronous>, transform_indices = @transform_7, window_bounds = array<i64: 32, 32>}, {pipeline_mode = #tpu.pipeline_mode<synchronous>, transform_indices = @transform_8, window_bounds = array<i64: 1, 32>}, {pipeline_mode = #tpu.pipeline_mode<synchronous>, transform_indices = @transform_9, window_bounds = array<i64: 1, 32>}, {pipeline_mode = #tpu.pipeline_mode<synchronous>, transform_indices = @transform_10, window_bounds = array<i64: 32, 32>}, {pipeline_mode = #tpu.pipeline_mode<synchronous>, transform_indices = @transform_11, window_bounds = array<i64: 1, 32>}, {pipeline_mode = #tpu.pipeline_mode<synchronous>, transform_indices = @transform_12, window_bounds = array<i64: 32, 96>}, {pipeline_mode = #tpu.pipeline_mode<synchronous>, transform_indices = @transform_13, window_bounds = array<i64: 32, 96>}, {pipeline_mode = #tpu.pipeline_mode<synchronous>, transform_indices = @transform_14, window_bounds = array<i64: 32, 96>}, {pipeline_mode = #tpu.pipeline_mode<synchronous>, transform_indices = @transform_15, window_bounds = array<i64: 32, 96>}, {pipeline_mode = #tpu.pipeline_mode<synchronous>, transform_indices = @transform_16, window_bounds = array<i64: 1, 96>}, {pipeline_mode = #tpu.pipeline_mode<synchronous>, transform_indices = @transform_17, window_bounds = array<i64: 1, 96>}, {pipeline_mode = #tpu.pipeline_mode<synchronous>, transform_indices = @transform_18, window_bounds = array<i64: 2, 32>}, {pipeline_mode = #tpu.pipeline_mode<synchronous>, transform_indices = @transform_19, window_bounds = array<i64: 2, 8>}]} {
    %c0 = arith.constant 0 : index
    %c0_0 = arith.constant 0 : index
    %0 = vector.load %arg1[%c0, %c0_0] : memref<2x32xf32, #tpu.memory_space<vmem>>, vector<2x32xf32>
    %c0_1 = arith.constant 0 : index
    %c0_2 = arith.constant 0 : index
    %1 = vector.load %arg2[%c0_1, %c0_2] : memref<2x1xf32, #tpu.memory_space<vmem>>, vector<2x1xf32>
    %cst = arith.constant 1.000000e+00 : f32
    %2 = vector.broadcast %cst : f32 to vector<2x1xf32>
    %3 = arith.subf %2, %1 : vector<2x1xf32>
    %c0_3 = arith.constant 0 : index
    %c0_4 = arith.constant 0 : index
    %4 = vector.load %arg3[%c0_3, %c0_4] : memref<2x32xf32, #tpu.memory_space<vmem>>, vector<1x32xf32>
    %5 = vector.broadcast %3 : vector<2x1xf32> to vector<2x32xf32>
    %6 = vector.broadcast %4 : vector<1x32xf32> to vector<2x32xf32>
    %7 = arith.mulf %5, %6 : vector<2x32xf32>
    %c1 = arith.constant 1 : index
    %c0_5 = arith.constant 0 : index
    %8 = vector.load %arg3[%c1, %c0_5] : memref<2x32xf32, #tpu.memory_space<vmem>>, vector<1x32xf32>
    %9 = vector.broadcast %1 : vector<2x1xf32> to vector<2x32xf32>
    %10 = vector.broadcast %8 : vector<1x32xf32> to vector<2x32xf32>
    %11 = arith.mulf %9, %10 : vector<2x32xf32>
    %12 = arith.addf %7, %11 : vector<2x32xf32>
    %c0_6 = arith.constant 0 : index
    %c0_7 = arith.constant 0 : index
    %13 = vector.load %arg4[%c0_6, %c0_7] : memref<2x32xf32, #tpu.memory_space<vmem>>, vector<2x32xf32>
    %c0_8 = arith.constant 0 : index
    %c0_9 = arith.constant 0 : index
    %14 = vector.load %arg7[%c0_8, %c0_9] : memref<32x32xf32, #tpu.memory_space<vmem>>, vector<32x32xf32>
    %cst_10 = arith.constant dense<0.000000e+00> : vector<2x32xf32>
    %15 = tpu.matmul %13, %14, %cst_10 {dimension_numbers = #tpu.dot_dimension_numbers<[1], [0], [0], [1], [0, 0, 1, 1], [], []>} : vector<2x32xf32>, vector<32x32xf32>, vector<2x32xf32> -> vector<2x32xf32>
    %c0_11 = arith.constant 0 : index
    %c0_12 = arith.constant 0 : index
    %16 = vector.load %arg9[%c0_11, %c0_12] : memref<1x32xf32, #tpu.memory_space<vmem>>, vector<1x32xf32>
    %17 = vector.broadcast %16 : vector<1x32xf32> to vector<2x32xf32>
    %18 = arith.addf %15, %17 : vector<2x32xf32>
    %c0_13 = arith.constant 0 : index
    %c0_14 = arith.constant 0 : index
    %c0_15 = arith.constant 0 : index
    %19 = vector.load %arg5[%c0_13, %c0_14, %c0_15] : memref<2x8x32xf32, #tpu.memory_space<vmem>>, vector<2x8x32xf32>
    %20 = vector.shape_cast %19 : vector<2x8x32xf32> to vector<16x32xf32>
    %c0_16 = arith.constant 0 : index
    %c0_17 = arith.constant 0 : index
    %21 = vector.load %arg8[%c0_16, %c0_17] : memref<32x32xf32, #tpu.memory_space<vmem>>, vector<32x32xf32>
    %cst_18 = arith.constant dense<0.000000e+00> : vector<16x32xf32>
    %22 = tpu.matmul %20, %21, %cst_18 {dimension_numbers = #tpu.dot_dimension_numbers<[1], [0], [0], [1], [0, 0, 1, 1], [], []>} : vector<16x32xf32>, vector<32x32xf32>, vector<16x32xf32> -> vector<16x32xf32>
    %23 = vector.shape_cast %22 : vector<16x32xf32> to vector<2x8x32xf32>
    %24 = vector.shape_cast %18 : vector<2x32xf32> to vector<2x1x32xf32>
    %25 = vector.broadcast %24 : vector<2x1x32xf32> to vector<2x8x32xf32>
    %26 = arith.addf %23, %25 : vector<2x8x32xf32>
    %27 = math.tanh %26 : vector<2x8x32xf32>
    %c0_19 = arith.constant 0 : index
    %c0_20 = arith.constant 0 : index
    %28 = vector.load %arg10[%c0_19, %c0_20] : memref<1x32xf32, #tpu.memory_space<vmem>>, vector<1x32xf32>
    %29 = vector.shape_cast %28 : vector<1x32xf32> to vector<1x1x32xf32>
    %30 = vector.broadcast %29 : vector<1x1x32xf32> to vector<2x8x32xf32>
    %31 = arith.mulf %27, %30 : vector<2x8x32xf32>
    %cst_21 = arith.constant dense<0.000000e+00> : vector<2x8xf32>
    %32 = vector.multi_reduction <add>, %31, %cst_21 [2] : vector<2x8x32xf32> to vector<2x8xf32>
    %33 = tpu.iota {dimensions = array<i32: 1>} : vector<2x8xi32>
    %c0_22 = arith.constant 0 : index
    %c0_23 = arith.constant 0 : index
    %34 = vector.load %arg6[%c0_22, %c0_23] : memref<2x1xi32, #tpu.memory_space<vmem>>, vector<2x1xi32>
    %35 = vector.broadcast %34 : vector<2x1xi32> to vector<2x8xi32>
    %36 = arith.cmpi slt, %33, %35 : vector<2x8xi32>
    %cst_24 = arith.constant -1.000000e+10 : f32
    %37 = vector.broadcast %cst_24 : f32 to vector<2x8xf32>
    %38 = arith.select %36, %32, %37 : vector<2x8xi1>, vector<2x8xf32>
    %cst_25 = arith.constant dense<0xFF800000> : vector<2xf32>
    %39 = vector.multi_reduction <maximumf>, %38, %cst_25 [1] : vector<2x8xf32> to vector<2xf32>
    %40 = vector.shape_cast %39 : vector<2xf32> to vector<2x1xf32>
    %41 = vector.broadcast %40 : vector<2x1xf32> to vector<2x8xf32>
    %42 = arith.subf %38, %41 : vector<2x8xf32>
    %43 = math.exp %42 : vector<2x8xf32>
    %cst_26 = arith.constant dense<0.000000e+00> : vector<2xf32>
    %44 = vector.multi_reduction <add>, %43, %cst_26 [1] : vector<2x8xf32> to vector<2xf32>
    %45 = vector.shape_cast %44 : vector<2xf32> to vector<2x1xf32>
    %46 = vector.broadcast %45 : vector<2x1xf32> to vector<2x8xf32>
    %47 = arith.divf %43, %46 : vector<2x8xf32>
    %c0_27 = arith.constant 0 : index
    %c0_28 = arith.constant 0 : index
    %48 = vector.load %arg20[%c0_27, %c0_28] : memref<2x8xf32, #tpu.memory_space<vmem>>, vector<2x8xf32>
    tpu.vector_store %arg20[%c0_27, %c0_28], %47 {strides = array<i32>} : memref<2x8xf32, #tpu.memory_space<vmem>>, vector<2x8xf32>,
    %49 = vector.shape_cast %47 : vector<2x8xf32> to vector<2x1x8xf32>
    %c0_29 = arith.constant 0 : index
    %c0_30 = arith.constant 0 : index
    %c0_31 = arith.constant 0 : index
    %50 = vector.load %arg5[%c0_29, %c0_30, %c0_31] : memref<2x8x32xf32, #tpu.memory_space<vmem>>, vector<2x8x32xf32>
    "tpu.trace_start"() <{level = 10 : i32, message = "nqt,nte->nqe"}> : () -> ()
    %cst_32 = arith.constant dense<0.000000e+00> : vector<2x1x32xf32>
    %51 = tpu.matmul %49, %50, %cst_32 {dimension_numbers = #tpu.dot_dimension_numbers<[2], [1], [1], [2], [0, 0, 0, 1, 1, 2], [0], [0]>} : vector<2x1x8xf32>, vector<2x8x32xf32>, vector<2x1x32xf32> -> vector<2x1x32xf32>
    "tpu.trace_stop"() : () -> ()
    %52 = vector.shape_cast %51 : vector<2x1x32xf32> to vector<2x32xf32>
    %c0_33 = arith.constant 0 : index
    %c0_34 = arith.constant 0 : index
    %53 = vector.load %arg11[%c0_33, %c0_34] : memref<32x32xf32, #tpu.memory_space<vmem>>, vector<32x32xf32>
    %cst_35 = arith.constant dense<0.000000e+00> : vector<2x32xf32>
    %54 = tpu.matmul %52, %53, %cst_35 {dimension_numbers = #tpu.dot_dimension_numbers<[1], [0], [0], [1], [0, 0, 1, 1], [], []>} : vector<2x32xf32>, vector<32x32xf32>, vector<2x32xf32> -> vector<2x32xf32>
    %c0_36 = arith.constant 0 : index
    %c0_37 = arith.constant 0 : index
    %55 = vector.load %arg12[%c0_36, %c0_37] : memref<1x32xf32, #tpu.memory_space<vmem>>, vector<1x32xf32>
    %56 = vector.broadcast %55 : vector<1x32xf32> to vector<2x32xf32>
    %57 = arith.addf %54, %56 : vector<2x32xf32>
    %c0_38 = arith.constant 0 : index
    %c0_39 = arith.constant 0 : index
    %58 = vector.load %arg13[%c0_38, %c0_39] : memref<32x96xf32, #tpu.memory_space<vmem>>, vector<32x96xf32>
    %cst_40 = arith.constant dense<0.000000e+00> : vector<2x96xf32>
    %59 = tpu.matmul %0, %58, %cst_40 {dimension_numbers = #tpu.dot_dimension_numbers<[1], [0], [0], [1], [0, 0, 1, 1], [], []>} : vector<2x32xf32>, vector<32x96xf32>, vector<2x96xf32> -> vector<2x96xf32>
    %c0_41 = arith.constant 0 : index
    %c0_42 = arith.constant 0 : index
    %60 = vector.load %arg14[%c0_41, %c0_42] : memref<32x96xf32, #tpu.memory_space<vmem>>, vector<32x96xf32>
    %cst_43 = arith.constant dense<0.000000e+00> : vector<2x96xf32>
    %61 = tpu.matmul %57, %60, %cst_43 {dimension_numbers = #tpu.dot_dimension_numbers<[1], [0], [0], [1], [0, 0, 1, 1], [], []>} : vector<2x32xf32>, vector<32x96xf32>, vector<2x96xf32> -> vector<2x96xf32>
    %62 = arith.addf %59, %61 : vector<2x96xf32>
    %c0_44 = arith.constant 0 : index
    %c0_45 = arith.constant 0 : index
    %63 = vector.load %arg15[%c0_44, %c0_45] : memref<32x96xf32, #tpu.memory_space<vmem>>, vector<32x96xf32>
    %cst_46 = arith.constant dense<0.000000e+00> : vector<2x96xf32>
    %64 = tpu.matmul %12, %63, %cst_46 {dimension_numbers = #tpu.dot_dimension_numbers<[1], [0], [0], [1], [0, 0, 1, 1], [], []>} : vector<2x32xf32>, vector<32x96xf32>, vector<2x96xf32> -> vector<2x96xf32>
    %65 = arith.addf %62, %64 : vector<2x96xf32>
    %c0_47 = arith.constant 0 : index
    %c0_48 = arith.constant 0 : index
    %66 = vector.load %arg17[%c0_47, %c0_48] : memref<1x96xf32, #tpu.memory_space<vmem>>, vector<1x96xf32>
    %67 = vector.broadcast %66 : vector<1x96xf32> to vector<2x96xf32>
    %68 = arith.addf %65, %67 : vector<2x96xf32>
    %c0_49 = arith.constant 0 : index
    %c0_50 = arith.constant 0 : index
    %69 = vector.load %arg16[%c0_49, %c0_50] : memref<32x96xf32, #tpu.memory_space<vmem>>, vector<32x96xf32>
    %cst_51 = arith.constant dense<0.000000e+00> : vector<2x96xf32>
    %70 = tpu.matmul %13, %69, %cst_51 {dimension_numbers = #tpu.dot_dimension_numbers<[1], [0], [0], [1], [0, 0, 1, 1], [], []>} : vector<2x32xf32>, vector<32x96xf32>, vector<2x96xf32> -> vector<2x96xf32>
    %c0_52 = arith.constant 0 : index
    %c0_53 = arith.constant 0 : index
    %71 = vector.load %arg18[%c0_52, %c0_53] : memref<1x96xf32, #tpu.memory_space<vmem>>, vector<1x96xf32>
    %72 = vector.broadcast %71 : vector<1x96xf32> to vector<2x96xf32>
    %73 = arith.addf %70, %72 : vector<2x96xf32>
    %74 = vector.extract_strided_slice %68 {offsets = [0, 0], sizes = [2, 32], strides = [1, 1]} : vector<2x96xf32> to vector<2x32xf32>
    %75 = vector.extract_strided_slice %73 {offsets = [0, 0], sizes = [2, 32], strides = [1, 1]} : vector<2x96xf32> to vector<2x32xf32>
    %76 = arith.addf %74, %75 : vector<2x32xf32>
    %77 = arith.negf %76 : vector<2x32xf32>
    %78 = math.exp %77 : vector<2x32xf32>
    %cst_54 = arith.constant 1.000000e+00 : f32
    %79 = vector.broadcast %cst_54 : f32 to vector<2x32xf32>
    %80 = arith.addf %79, %78 : vector<2x32xf32>
    %81 = arith.divf %79, %80 : vector<2x32xf32>
    %82 = vector.extract_strided_slice %68 {offsets = [0, 32], sizes = [2, 32], strides = [1, 1]} : vector<2x96xf32> to vector<2x32xf32>
    %83 = vector.extract_strided_slice %73 {offsets = [0, 32], sizes = [2, 32], strides = [1, 1]} : vector<2x96xf32> to vector<2x32xf32>
    %84 = arith.addf %82, %83 : vector<2x32xf32>
    %85 = arith.negf %84 : vector<2x32xf32>
    %86 = math.exp %85 : vector<2x32xf32>
    %cst_55 = arith.constant 1.000000e+00 : f32
    %87 = vector.broadcast %cst_55 : f32 to vector<2x32xf32>
    %88 = arith.addf %87, %86 : vector<2x32xf32>
    %89 = arith.divf %87, %88 : vector<2x32xf32>
    %90 = vector.extract_strided_slice %68 {offsets = [0, 64], sizes = [2, 32], strides = [1, 1]} : vector<2x96xf32> to vector<2x32xf32>
    %91 = vector.extract_strided_slice %73 {offsets = [0, 64], sizes = [2, 32], strides = [1, 1]} : vector<2x96xf32> to vector<2x32xf32>
    %92 = arith.mulf %81, %91 : vector<2x32xf32>
    %93 = arith.addf %90, %92 : vector<2x32xf32>
    %94 = math.tanh %93 : vector<2x32xf32>
    %cst_56 = arith.constant 1.000000e+00 : f32
    %95 = vector.broadcast %cst_56 : f32 to vector<2x32xf32>
    %96 = arith.subf %95, %89 : vector<2x32xf32>
    %97 = arith.mulf %96, %94 : vector<2x32xf32>
    %98 = arith.mulf %89, %13 : vector<2x32xf32>
    %99 = arith.addf %97, %98 : vector<2x32xf32>
    %c0_57 = arith.constant 0 : index
    %c0_58 = arith.constant 0 : index
    %100 = vector.load %arg19[%c0_57, %c0_58] : memref<2x32xf32, #tpu.memory_space<vmem>>, vector<2x32xf32>
    tpu.vector_store %arg19[%c0_57, %c0_58], %99 {strides = array<i32>} : memref<2x32xf32, #tpu.memory_space<vmem>>, vector<2x32xf32>,
    return
  }
  func.func @transform_0(%arg0: i32) -> (i32, i32) {
    %c0_i32 = arith.constant 0 : i32
    %c0_i32_0 = arith.constant 0 : i32
    %c0_i32_1 = arith.constant 0 : i32
    return %c0_i32, %c0_i32_0 : i32, i32
  }
  func.func @transform_1(%arg0: i32) -> (i32, i32) {
    %c0_i32 = arith.constant 0 : i32
    %c0_i32_0 = arith.constant 0 : i32
    %c0_i32_1 = arith.constant 0 : i32
    return %c0_i32, %c0_i32_0 : i32, i32
  }
  func.func @transform_2(%arg0: i32) -> (i32, i32) {
    %c0_i32 = arith.constant 0 : i32
    %c0_i32_0 = arith.constant 0 : i32
    %c0_i32_1 = arith.constant 0 : i32
    return %c0_i32, %c0_i32_0 : i32, i32
  }
  func.func @transform_3(%arg0: i32) -> (i32, i32) {
    %c0_i32 = arith.constant 0 : i32
    %c0_i32_0 = arith.constant 0 : i32
    %c0_i32_1 = arith.constant 0 : i32
    return %c0_i32, %c0_i32_0 : i32, i32
  }
  func.func @transform_4(%arg0: i32) -> (i32, i32, i32) {
    %c0_i32 = arith.constant 0 : i32
    %c0_i32_0 = arith.constant 0 : i32
    %c0_i32_1 = arith.constant 0 : i32
    %c0_i32_2 = arith.constant 0 : i32
    return %c0_i32, %c0_i32_0, %c0_i32_1 : i32, i32, i32
  }
  func.func @transform_5(%arg0: i32) -> (i32, i32) {
    %c0_i32 = arith.constant 0 : i32
    %c0_i32_0 = arith.constant 0 : i32
    %c0_i32_1 = arith.constant 0 : i32
    return %c0_i32, %c0_i32_0 : i32, i32
  }
  func.func @transform_6(%arg0: i32) -> (i32, i32) {
    %c0_i32 = arith.constant 0 : i32
    %c0_i32_0 = arith.constant 0 : i32
    %c0_i32_1 = arith.constant 0 : i32
    return %c0_i32, %c0_i32_0 : i32, i32
  }
  func.func @transform_7(%arg0: i32) -> (i32, i32) {
    %c0_i32 = arith.constant 0 : i32
    %c0_i32_0 = arith.constant 0 : i32
    %c0_i32_1 = arith.constant 0 : i32
    return %c0_i32, %c0_i32_0 : i32, i32
  }
  func.func @transform_8(%arg0: i32) -> (i32, i32) {
    %c0_i32 = arith.constant 0 : i32
    %c0_i32_0 = arith.constant 0 : i32
    %c0_i32_1 = arith.constant 0 : i32
    return %c0_i32, %c0_i32_0 : i32, i32
  }
  func.func @transform_9(%arg0: i32) -> (i32, i32) {
    %c0_i32 = arith.constant 0 : i32
    %c0_i32_0 = arith.constant 0 : i32
    %c0_i32_1 = arith.constant 0 : i32
    return %c0_i32, %c0_i32_0 : i32, i32
  }
  func.func @transform_10(%arg0: i32) -> (i32, i32) {
    %c0_i32 = arith.constant 0 : i32
    %c0_i32_0 = arith.constant 0 : i32
    %c0_i32_1 = arith.constant 0 : i32
    return %c0_i32, %c0_i32_0 : i32, i32
  }
  func.func @transform_11(%arg0: i32) -> (i32, i32) {
    %c0_i32 = arith.constant 0 : i32
    %c0_i32_0 = arith.constant 0 : i32
    %c0_i32_1 = arith.constant 0 : i32
    return %c0_i32, %c0_i32_0 : i32, i32
  }
  func.func @transform_12(%arg0: i32) -> (i32, i32) {
    %c0_i32 = arith.constant 0 : i32
    %c0_i32_0 = arith.constant 0 : i32
    %c0_i32_1 = arith.constant 0 : i32
    return %c0_i32, %c0_i32_0 : i32, i32
  }
  func.func @transform_13(%arg0: i32) -> (i32, i32) {
    %c0_i32 = arith.constant 0 : i32
    %c0_i32_0 = arith.constant 0 : i32
    %c0_i32_1 = arith.constant 0 : i32
    return %c0_i32, %c0_i32_0 : i32, i32
  }
  func.func @transform_14(%arg0: i32) -> (i32, i32) {
    %c0_i32 = arith.constant 0 : i32
    %c0_i32_0 = arith.constant 0 : i32
    %c0_i32_1 = arith.constant 0 : i32
    return %c0_i32, %c0_i32_0 : i32, i32
  }
  func.func @transform_15(%arg0: i32) -> (i32, i32) {
    %c0_i32 = arith.constant 0 : i32
    %c0_i32_0 = arith.constant 0 : i32
    %c0_i32_1 = arith.constant 0 : i32
    return %c0_i32, %c0_i32_0 : i32, i32
  }
  func.func @transform_16(%arg0: i32) -> (i32, i32) {
    %c0_i32 = arith.constant 0 : i32
    %c0_i32_0 = arith.constant 0 : i32
    %c0_i32_1 = arith.constant 0 : i32
    return %c0_i32, %c0_i32_0 : i32, i32
  }
  func.func @transform_17(%arg0: i32) -> (i32, i32) {
    %c0_i32 = arith.constant 0 : i32
    %c0_i32_0 = arith.constant 0 : i32
    %c0_i32_1 = arith.constant 0 : i32
    return %c0_i32, %c0_i32_0 : i32, i32
  }
  func.func @transform_18(%arg0: i32) -> (i32, i32) {
    %c0_i32 = arith.constant 0 : i32
    %c0_i32_0 = arith.constant 0 : i32
    %c0_i32_1 = arith.constant 0 : i32
    return %c0_i32, %c0_i32_0 : i32, i32
  }
  func.func @transform_19(%arg0: i32) -> (i32, i32) {
    %c0_i32 = arith.constant 0 : i32
    %c0_i32_0 = arith.constant 0 : i32
    %c0_i32_1 = arith.constant 0 : i32
    return %c0_i32, %c0_i32_0 : i32, i32
  }
}

</mosaic_0001>

<llo_original>
// kernel: tpu_custom_call.1
$region0: #{tpu_custom_call.1}
  #allocation0 [shape = 'u32[]', space=smem, size = 0x4, offset = 0x4, fixed_abs, tag = 'smem constant byte address 0x4 - core index']
  #allocation1 [shape = 'u32[144,128]{1,0:T(1,128)}', space=vmem, size = 0x12000, scoped, tag = 'internal scratch']
  %s0 = inlined_call_operand.hbm [shape: f32[2,32], index: 0, kind: input, shape index: {}]
  %s1 = inlined_call_operand.vmem [shape: f32[2,1], index: 1, kind: input, shape index: {}]
  %s2 = inlined_call_operand.hbm [shape: f32[2,32], index: 2, kind: input, shape index: {}]
  %s3 = inlined_call_operand.hbm [shape: f32[2,32], index: 3, kind: input, shape index: {}]
  %s4 = inlined_call_operand.hbm [shape: f32[2,8,32], index: 4, kind: input, shape index: {}]
  %s5 = inlined_call_operand.vmem [shape: s32[2,1], index: 5, kind: input, shape index: {}]
  %s6 = inlined_call_operand.hbm [shape: f32[32,32], index: 6, kind: input, shape index: {}]
  %s7 = inlined_call_operand.vmem [shape: f32[32,32], index: 7, kind: input, shape index: {}]
  %s8 = inlined_call_operand.hbm [shape: f32[1,32], index: 8, kind: input, shape index: {}]
  %s9 = inlined_call_operand.hbm [shape: f32[1,32], index: 9, kind: input, shape index: {}]
  %s10 = inlined_call_operand.hbm [shape: f32[32,32], index: 10, kind: input, shape index: {}]
  %s11 = inlined_call_operand.hbm [shape: f32[1,32], index: 11, kind: input, shape index: {}]
  %s12 = inlined_call_operand.hbm [shape: f32[32,96], index: 12, kind: input, shape index: {}]
  %s13 = inlined_call_operand.hbm [shape: f32[32,96], index: 13, kind: input, shape index: {}]
  %s14 = inlined_call_operand.hbm [shape: f32[32,96], index: 14, kind: input, shape index: {}]
  %s15 = inlined_call_operand.vmem [shape: f32[32,96], index: 15, kind: input, shape index: {}]
  %s16 = inlined_call_operand.vmem [shape: f32[1,96], index: 16, kind: input, shape index: {}]
  %s17 = inlined_call_operand.vmem [shape: f32[1,96], index: 17, kind: input, shape index: {}]
  %s18 = inlined_call_operand.hbm [shape: f32[2,32], index: 18, kind: output, shape index: {0}]
  %s19 = inlined_call_operand.hbm [shape: f32[2,8], index: 19, kind: output, shape index: {1}]
  %20 = xla_tuple %s18, %s19
  %s21 = sld [smem:[#allocation0]]
  $region138: #{tpu_custom_call.1} parent=0
    _
  %s23 = ssub.s32 1, %s21
  %s24 = scalar_select 0, %s23, %s21
  $region1: #{tpu_custom_call.1} parent=0
    #allocation2 [shape = 'u8[1024]{0}', space=vmem, size = 0x400, scoped, tag = 'input window, operand 0, single buffered']
    #allocation3 [shape = 's32[1]{0}', space=sflag, size = 0x4, scoped, tag = 'scoped memory for tpu_custom_call.1']
    #allocation4 [shape = 's32[1]{0}', space=sflag, size = 0x4, scoped, tag = 'scoped memory for tpu_custom_call.1']
    #allocation5 [shape = 'u8[1024]{0}', space=vmem, size = 0x400, scoped, tag = 'input window, operand 2, single buffered']
    #allocation6 [shape = 's32[1]{0}', space=sflag, size = 0x4, scoped, tag = 'scoped memory for tpu_custom_call.1']
    #allocation7 [shape = 'u8[1024]{0}', space=vmem, size = 0x400, scoped, tag = 'input window, operand 3, single buffered']
    #allocation8 [shape = 'u8[8192]{0}', space=vmem, size = 0x2000, scoped, tag = 'input window, operand 4, single buffered']
    #allocation9 [shape = 's32[1]{0}', space=sflag, size = 0x4, scoped, tag = 'scoped memory for tpu_custom_call.1']
    #allocation10 [shape = 'u8[16384]{0}', space=vmem, size = 0x4000, scoped, tag = 'input window, operand 6, single buffered']
    #allocation11 [shape = 'u8[512]{0}', space=vmem, size = 0x400, scoped, tag = 'input window, operand 8, single buffered']
    #allocation12 [shape = 's32[1]{0}', space=sflag, size = 0x4, scoped, tag = 'scoped memory for tpu_custom_call.1']
    #allocation13 [shape = 'u8[512]{0}', space=vmem, size = 0x400, scoped, tag = 'input window, operand 9, single buffered']
    #allocation14 [shape = 'u8[16384]{0}', space=vmem, size = 0x4000, scoped, tag = 'input window, operand 10, single buffered']
    #allocation15 [shape = 's32[1]{0}', space=sflag, size = 0x4, scoped, tag = 'scoped memory for tpu_custom_call.1']
    #allocation16 [shape = 'u8[512]{0}', space=vmem, size = 0x400, scoped, tag = 'input window, operand 11, single buffered']
    #allocation17 [shape = 'u8[16384]{0}', space=vmem, size = 0x4000, scoped, tag = 'input window, operand 12, single buffered']
    #allocation18 [shape = 's32[1]{0}', space=sflag, size = 0x4, scoped, tag = 'scoped memory for tpu_custom_call.1']
    #allocation19 [shape = 'u8[16384]{0}', space=vmem, size = 0x4000, scoped, tag = 'input window, operand 13, single buffered']
    #allocation20 [shape = 'u8[16384]{0}', space=vmem, size = 0x4000, scoped, tag = 'input window, operand 14, single buffered']
    #allocation21 [shape = 's32[1]{0}', space=sflag, size = 0x4, scoped, tag = 'scoped memory for tpu_custom_call.1']
    #allocation22 [shape = 'u8[1024]{0}', space=vmem, size = 0x400, scoped, tag = 'output window, operand 0, single buffered']
    #allocation23 [shape = 'u8[1024]{0}', space=vmem, size = 0x400, scoped, tag = 'output window, operand 1, single buffered']
    #allocation24 [shape = 's32[1]{0}', space=sflag, size = 0x4, scoped, tag = 'scoped memory for tpu_custom_call.1']
    %25 = vsyncpa [#allocation3], 0
    %26 = vsyncpa [#allocation6], 0
    %27 = vsyncpa [#allocation9], 0
    %28 = vsyncpa [#allocation12], 0
    %29 = vsyncpa [#allocation15], 0
    %30 = vsyncpa [#allocation18], 0
    %31 = vsyncpa [#allocation21], 0
    %32 = vsyncpa [#allocation4], 0
    %33 = vsyncpa [#allocation24], 0
    // Predicated region
    $region2: #{tpu_custom_call.1} parent=1 // pred_check
      _
    $region3: #{tpu_custom_call.1} parent=1 // pred_check_branch
      %35 = sbr.rel (0) target = $region5
    $region4: #{tpu_custom_call.1} parent=1 // pred_region
      %s37 = ssub.s32 32, 32
      %38 = vsyncadd [#allocation3], %s37
      %s40 = sshll.u32 [#allocation2], 4
      %s41 = int_to_ptr.vmem [resolvable:$true] %s40
      %43 = dma.hbm_to_vmem [thread:$0]  %s0, 32, %s41, [#allocation3]
    $region5: #{tpu_custom_call.1} parent=1 // pred_fallthru
      _
    // Predicated region
    $region6: #{tpu_custom_call.1} parent=1 // pred_check
      _
    $region7: #{tpu_custom_call.1} parent=1 // pred_check_branch
      %45 = sbr.rel (0) target = $region9
    $region8: #{tpu_custom_call.1} parent=1 // pred_region
      _
    $region9: #{tpu_custom_call.1} parent=1 // pred_fallthru
      _
    // Predicated region
    $region10: #{tpu_custom_call.1} parent=1 // pred_check
      _
    $region11: #{tpu_custom_call.1} parent=1 // pred_check_branch
      %47 = sbr.rel (0) target = $region13
    $region12: #{tpu_custom_call.1} parent=1 // pred_region
      %s49 = ssub.s32 32, 32
      %50 = vsyncadd [#allocation6], %s49
      %s52 = sshll.u32 [#allocation5], 4
      %s53 = int_to_ptr.vmem [resolvable:$true] %s52
      %55 = dma.hbm_to_vmem [thread:$0]  %s2, 32, %s53, [#allocation6]
    $region13: #{tpu_custom_call.1} parent=1 // pred_fallthru
      _
    // Predicated region
    $region14: #{tpu_custom_call.1} parent=1 // pred_check
      _
    $region15: #{tpu_custom_call.1} parent=1 // pred_check_branch
      %57 = sbr.rel (0) target = $region17
    $region16: #{tpu_custom_call.1} parent=1 // pred_region
      %s59 = ssub.s32 32, 32
      %60 = vsyncadd [#allocation6], %s59
      %s62 = sshll.u32 [#allocation7], 4
      %s63 = int_to_ptr.vmem [resolvable:$true] %s62
      %65 = dma.hbm_to_vmem [thread:$0]  %s3, 32, %s63, [#allocation6]
    $region17: #{tpu_custom_call.1} parent=1 // pred_fallthru
      _
    // Predicated region
    $region18: #{tpu_custom_call.1} parent=1 // pred_check
      _
    $region19: #{tpu_custom_call.1} parent=1 // pred_check_branch
      %67 = sbr.rel (0) target = $region21
    $region20: #{tpu_custom_call.1} parent=1 // pred_region
      %s69 = ssub.s32 256, 256
      %70 = vsyncadd [#allocation9], %s69
      %s71 = sshll.u32 [#allocation8], 4
      %s72 = int_to_ptr.vmem [resolvable:$true] %s71
      %77 = dma.hbm_to_vmem [thread:$0]  %s4, 256, %s72, [#allocation9], 128, 128, 8
    $region21: #{tpu_custom_call.1} parent=1 // pred_fallthru
      _
    // Predicated region
    $region22: #{tpu_custom_call.1} parent=1 // pred_check
      _
    $region23: #{tpu_custom_call.1} parent=1 // pred_check_branch
      %79 = sbr.rel (0) target = $region25
    $region24: #{tpu_custom_call.1} parent=1 // pred_region
      _
    $region25: #{tpu_custom_call.1} parent=1 // pred_fallthru
      _
    // Predicated region
    $region26: #{tpu_custom_call.1} parent=1 // pred_check
      _
    $region27: #{tpu_custom_call.1} parent=1 // pred_check_branch
      %81 = sbr.rel (0) target = $region29
    $region28: #{tpu_custom_call.1} parent=1 // pred_region
      %s83 = ssub.s32 512, 512
      %84 = vsyncadd [#allocation9], %s83
      %s85 = sshll.u32 [#allocation10], 4
      %s86 = int_to_ptr.vmem [resolvable:$true] %s85
      %91 = dma.hbm_to_vmem [thread:$0]  %s6, 512, %s86, [#allocation9], 128, 128, 8
    $region29: #{tpu_custom_call.1} parent=1 // pred_fallthru
      _
    // Predicated region
    $region30: #{tpu_custom_call.1} parent=1 // pred_check
      _
    $region31: #{tpu_custom_call.1} parent=1 // pred_check_branch
      %93 = sbr.rel (0) target = $region33
    $region32: #{tpu_custom_call.1} parent=1 // pred_region
      _
    $region33: #{tpu_custom_call.1} parent=1 // pred_fallthru
      _
    // Predicated region
    $region34: #{tpu_custom_call.1} parent=1 // pred_check
      _
    $region35: #{tpu_custom_call.1} parent=1 // pred_check_branch
      %95 = sbr.rel (0) target = $region37
    $region36: #{tpu_custom_call.1} parent=1 // pred_region
      %s97 = ssub.s32 16, 16
      %98 = vsyncadd [#allocation12], %s97
      %s100 = sshll.u32 [#allocation11], 4
      %s101 = int_to_ptr.vmem [resolvable:$true] %s100
      %103 = dma.hbm_to_vmem [thread:$0]  %s8, 16, %s101, [#allocation12]
    $region37: #{tpu_custom_call.1} parent=1 // pred_fallthru
      _
    // Predicated region
    $region38: #{tpu_custom_call.1} parent=1 // pred_check
      _
    $region39: #{tpu_custom_call.1} parent=1 // pred_check_branch
      %105 = sbr.rel (0) target = $region41
    $region40: #{tpu_custom_call.1} parent=1 // pred_region
      %s107 = ssub.s32 16, 16
      %108 = vsyncadd [#allocation12], %s107
      %s110 = sshll.u32 [#allocation13], 4
      %s111 = int_to_ptr.vmem [resolvable:$true] %s110
      %113 = dma.hbm_to_vmem [thread:$0]  %s9, 16, %s111, [#allocation12]
    $region41: #{tpu_custom_call.1} parent=1 // pred_fallthru
      _
    // Predicated region
    $region42: #{tpu_custom_call.1} parent=1 // pred_check
      _
    $region43: #{tpu_custom_call.1} parent=1 // pred_check_branch
      %115 = sbr.rel (0) target = $region45
    $region44: #{tpu_custom_call.1} parent=1 // pred_region
      %s117 = ssub.s32 512, 512
      %118 = vsyncadd [#allocation15], %s117
      %s119 = sshll.u32 [#allocation14], 4
      %s120 = int_to_ptr.vmem [resolvable:$true] %s119
      %125 = dma.hbm_to_vmem [thread:$0]  %s10, 512, %s120, [#allocation15], 128, 128, 8
    $region45: #{tpu_custom_call.1} parent=1 // pred_fallthru
      _
    // Predicated region
    $region46: #{tpu_custom_call.1} parent=1 // pred_check
      _
    $region47: #{tpu_custom_call.1} parent=1 // pred_check_branch
      %127 = sbr.rel (0) target = $region49
    $region48: #{tpu_custom_call.1} parent=1 // pred_region
      %s129 = ssub.s32 16, 16
      %130 = vsyncadd [#allocation15], %s129
      %s132 = sshll.u32 [#allocation16], 4
      %s133 = int_to_ptr.vmem [resolvable:$true] %s132
      %135 = dma.hbm_to_vmem [thread:$0]  %s11, 16, %s133, [#allocation15]
    $region49: #{tpu_custom_call.1} parent=1 // pred_fallthru
      _
    // Predicated region
    $region50: #{tpu_custom_call.1} parent=1 // pred_check
      _
    $region51: #{tpu_custom_call.1} parent=1 // pred_check_branch
      %137 = sbr.rel (0) target = $region53
    $region52: #{tpu_custom_call.1} parent=1 // pred_region
      %s139 = ssub.s32 512, 512
      %140 = vsyncadd [#allocation18], %s139
      %s141 = sshll.u32 [#allocation17], 4
      %s142 = int_to_ptr.vmem [resolvable:$true] %s141
      %147 = dma.hbm_to_vmem [thread:$0]  %s12, 512, %s142, [#allocation18], 128, 128, 8
    $region53: #{tpu_custom_call.1} parent=1 // pred_fallthru
      _
    // Predicated region
    $region54: #{tpu_custom_call.1} parent=1 // pred_check
      _
    $region55: #{tpu_custom_call.1} parent=1 // pred_check_branch
      %149 = sbr.rel (0) target = $region57
    $region56: #{tpu_custom_call.1} parent=1 // pred_region
      %s151 = ssub.s32 512, 512
      %152 = vsyncadd [#allocation18], %s151
      %s153 = sshll.u32 [#allocation19], 4
      %s154 = int_to_ptr.vmem [resolvable:$true] %s153
      %159 = dma.hbm_to_vmem [thread:$0]  %s13, 512, %s154, [#allocation18], 128, 128, 8
    $region57: #{tpu_custom_call.1} parent=1 // pred_fallthru
      _
    // Predicated region
    $region58: #{tpu_custom_call.1} parent=1 // pred_check
      _
    $region59: #{tpu_custom_call.1} parent=1 // pred_check_branch
      %161 = sbr.rel (0) target = $region61
    $region60: #{tpu_custom_call.1} parent=1 // pred_region
      %s163 = ssub.s32 512, 512
      %164 = vsyncadd [#allocation21], %s163
      %s165 = sshll.u32 [#allocation20], 4
      %s166 = int_to_ptr.vmem [resolvable:$true] %s165
      %171 = dma.hbm_to_vmem [thread:$0]  %s14, 512, %s166, [#allocation21], 128, 128, 8
    $region61: #{tpu_custom_call.1} parent=1 // pred_fallthru
      _
    // Predicated region
    $region62: #{tpu_custom_call.1} parent=1 // pred_check
      _
    $region63: #{tpu_custom_call.1} parent=1 // pred_check_branch
      %173 = sbr.rel (0) target = $region65
    $region64: #{tpu_custom_call.1} parent=1 // pred_region
      _
    $region65: #{tpu_custom_call.1} parent=1 // pred_fallthru
      _
    // Predicated region
    $region66: #{tpu_custom_call.1} parent=1 // pred_check
      _
    $region67: #{tpu_custom_call.1} parent=1 // pred_check_branch
      %175 = sbr.rel (0) target = $region69
    $region68: #{tpu_custom_call.1} parent=1 // pred_region
      _
    $region69: #{tpu_custom_call.1} parent=1 // pred_fallthru
      _
    // Predicated region
    $region70: #{tpu_custom_call.1} parent=1 // pred_check
      _
    $region71: #{tpu_custom_call.1} parent=1 // pred_check_branch
      %177 = sbr.rel (0) target = $region73
    $region72: #{tpu_custom_call.1} parent=1 // pred_region
      _
    $region73: #{tpu_custom_call.1} parent=1 // pred_fallthru
      _
    // Predicated region
    $region74: #{tpu_custom_call.1} parent=1 // pred_check
      _
    $region75: #{tpu_custom_call.1} parent=1 // pred_check_branch
      %179 = sbr.rel (0) target = $region77
    $region76: #{tpu_custom_call.1} parent=1 // pred_region
      %180 = dma.done [#allocation3], 32
    $region77: #{tpu_custom_call.1} parent=1 // pred_fallthru
      _
    // Predicated region
    $region78: #{tpu_custom_call.1} parent=1 // pred_check
      _
    $region79: #{tpu_custom_call.1} parent=1 // pred_check_branch
      %182 = sbr.rel (0) target = $region81
    $region80: #{tpu_custom_call.1} parent=1 // pred_region
      %183 = dma.done [#allocation6], 32
    $region81: #{tpu_custom_call.1} parent=1 // pred_fallthru
      _
    // Predicated region
    $region82: #{tpu_custom_call.1} parent=1 // pred_check
      _
    $region83: #{tpu_custom_call.1} parent=1 // pred_check_branch
      %185 = sbr.rel (0) target = $region85
    $region84: #{tpu_custom_call.1} parent=1 // pred_region
      %186 = dma.done [#allocation6], 32
    $region85: #{tpu_custom_call.1} parent=1 // pred_fallthru
      _
    // Predicated region
    $region86: #{tpu_custom_call.1} parent=1 // pred_check
      _
    $region87: #{tpu_custom_call.1} parent=1 // pred_check_branch
      %188 = sbr.rel (0) target = $region89
    $region88: #{tpu_custom_call.1} parent=1 // pred_region
      %189 = dma.done [#allocation9], 256
    $region89: #{tpu_custom_call.1} parent=1 // pred_fallthru
      _
    // Predicated region
    $region90: #{tpu_custom_call.1} parent=1 // pred_check
      _
    $region91: #{tpu_custom_call.1} parent=1 // pred_check_branch
      %191 = sbr.rel (0) target = $region93
    $region92: #{tpu_custom_call.1} parent=1 // pred_region
      %192 = dma.done [#allocation9], 512
    $region93: #{tpu_custom_call.1} parent=1 // pred_fallthru
      _
    // Predicated region
    $region94: #{tpu_custom_call.1} parent=1 // pred_check
      _
    $region95: #{tpu_custom_call.1} parent=1 // pred_check_branch
      %194 = sbr.rel (0) target = $region97
    $region96: #{tpu_custom_call.1} parent=1 // pred_region
      %195 = dma.done [#allocation12], 16
    $region97: #{tpu_custom_call.1} parent=1 // pred_fallthru
      _
    // Predicated region
    $region98: #{tpu_custom_call.1} parent=1 // pred_check
      _
    $region99: #{tpu_custom_call.1} parent=1 // pred_check_branch
      %197 = sbr.rel (0) target = $region101
    $region100: #{tpu_custom_call.1} parent=1 // pred_region
      %198 = dma.done [#allocation12], 16
    $region101: #{tpu_custom_call.1} parent=1 // pred_fallthru
      _
    // Predicated region
    $region102: #{tpu_custom_call.1} parent=1 // pred_check
      _
    $region103: #{tpu_custom_call.1} parent=1 // pred_check_branch
      %200 = sbr.rel (0) target = $region105
    $region104: #{tpu_custom_call.1} parent=1 // pred_region
      %201 = dma.done [#allocation15], 512
    $region105: #{tpu_custom_call.1} parent=1 // pred_fallthru
      _
    // Predicated region
    $region106: #{tpu_custom_call.1} parent=1 // pred_check
      _
    $region107: #{tpu_custom_call.1} parent=1 // pred_check_branch
      %203 = sbr.rel (0) target = $region109
    $region108: #{tpu_custom_call.1} parent=1 // pred_region
      %204 = dma.done [#allocation15], 16
    $region109: #{tpu_custom_call.1} parent=1 // pred_fallthru
      _
    // Predicated region
    $region110: #{tpu_custom_call.1} parent=1 // pred_check
      _
    $region111: #{tpu_custom_call.1} parent=1 // pred_check_branch
      %206 = sbr.rel (0) target = $region113
    $region112: #{tpu_custom_call.1} parent=1 // pred_region
      %207 = dma.done [#allocation18], 512
    $region113: #{tpu_custom_call.1} parent=1 // pred_fallthru
      _
    // Predicated region
    $region114: #{tpu_custom_call.1} parent=1 // pred_check
      _
    $region115: #{tpu_custom_call.1} parent=1 // pred_check_branch
      %209 = sbr.rel (0) target = $region117
    $region116: #{tpu_custom_call.1} parent=1 // pred_region
      %210 = dma.done [#allocation18], 512
    $region117: #{tpu_custom_call.1} parent=1 // pred_fallthru
      _
    // Predicated region
    $region118: #{tpu_custom_call.1} parent=1 // pred_check
      _
    $region119: #{tpu_custom_call.1} parent=1 // pred_check_branch
      %212 = sbr.rel (0) target = $region121
    $region120: #{tpu_custom_call.1} parent=1 // pred_region
      %213 = dma.done [#allocation21], 512
    $region121: #{tpu_custom_call.1} parent=1 // pred_fallthru
      _
    %v214 = vld [vmem:[#allocation2] sm:$0x3]
    %v215 = vld [vmem:[%s1] sm:$0x3]
    %v216 = vsub.f32 1.0, %v215
    %v217 = vld [vmem:[#allocation5] sm:$0x1]
    %219 = vset.pattern.permute.xlu0 0
    %220 = vperm.xlu0 %219, %v216
    %v221 = vpop.permute.xlu0 %220
    %v223 = vlaneseq
    %v224 = vshrl.u32 %v223, 7
    %v225 = vsub.s32 0, %v224
    %v226 = vrot.slane %v217, %v225
    %v227 = vmul.f32 %v221, %v226
    %v228 = vld [vmem:[#allocation5 + $0x1] sm:$0x1]
    %230 = vset.pattern.permute.xlu0 0
    %231 = vperm.xlu0 %230, %v215
    %v232 = vpop.permute.xlu0 %231
    %v234 = vlaneseq
    %v235 = vshrl.u32 %v234, 7
    %v236 = vsub.s32 0, %v235
    %v237 = vrot.slane %v228, %v236
    %v238 = vmul.f32 %v232, %v237
    %v239 = vadd.f32 %v227, %v238
    %v240 = vld [vmem:[#allocation7] sm:$0x3]
    %v241 = vld [vmem:[#allocation10] sm:$0xff]
    %v242 = vld [vmem:[#allocation10 + $0x8] sm:$0xff]
    %v243 = vld [vmem:[#allocation10 + $0x10] sm:$0xff]
    %v244 = vld [vmem:[#allocation10 + $0x18] sm:$0xff]
    %v245 = vld [vmem:[#allocation11] sm:$0x1]
    %v247 = vlaneseq
    %v248 = vshrl.u32 %v247, 7
    %v249 = vsub.s32 0, %v248
    %v250 = vrot.slane %v245, %v249
    %vm252 = vcmask 261120
    %v254 = vsel %vm252, %v240, 0
    %256 = vmatprep.subr.mxu0 0.0
    %257 = vmatpush1.msra.mxu0 %v241
    %258 = vmatprep.subr.mxu0 0.0
    %259 = vmatpush1.msra.mxu0 %v242
    %260 = vmatprep.subr.mxu0 0.0
    %261 = vmatpush1.msra.mxu0 %v243
    %262 = vmatprep.subr.mxu0 0.0
    %263 = vmatpush1.msra.mxu0 %v244
    %264 = vmatprep.subr.mxu0 0.0
    %265 = vmatpush1.msra.mxu0 0.0
    %266 = vmatprep.subr.mxu0 0.0
    %267 = vmatpush1.msra.mxu0 0.0
    %268 = vmatprep.subr.mxu0 0.0
    %269 = vmatpush1.msra.mxu0 0.0
    %270 = vmatprep.subr.mxu0 0.0
    %271 = vmatpush1.msra.mxu0 0.0
    %272 = vmatprep.subr.mxu0 0.0
    %273 = vmatpush1.msra.mxu0 0.0
    %274 = vmatprep.subr.mxu0 0.0
    %275 = vmatpush1.msra.mxu0 0.0
    %276 = vmatprep.subr.mxu0 0.0
    %277 = vmatpush1.msra.mxu0 0.0
    %278 = vmatprep.subr.mxu0 0.0
    %279 = vmatpush1.msra.mxu0 0.0
    %280 = vmatprep.subr.mxu0 0.0
    %281 = vmatpush1.msra.mxu0 0.0
    %282 = vmatprep.subr.mxu0 0.0
    %283 = vmatpush1.msra.mxu0 0.0
    %284 = vmatprep.subr.mxu0 0.0
    %285 = vmatpush1.msra.mxu0 0.0
    %286 = vmatprep.subr.mxu0 0.0
    %287 = vmatpush1.msra.mxu0 0.0
    %288 = vmatprep.subr.mxu0 0.0
    %289 = vmatpush1.msra.mxu0 0.0
    %290 = vmatprep.subr.mxu0 0.0
    %291 = vmatpush1.msra.mxu0 0.0
    %292 = vmatprep.subr.mxu0 0.0
    %293 = vmatpush1.msra.mxu0 0.0
    %294 = vmatprep.subr.mxu0 0.0
    %295 = vmatpush1.msra.mxu0 0.0
    %296 = vmatprep.subr.mxu0 0.0
    %297 = vmatpush1.msra.mxu0 0.0
    %298 = vmatprep.subr.mxu0 0.0
    %299 = vmatpush1.msra.mxu0 0.0
    %300 = vmatprep.subr.mxu0 0.0
    %301 = vmatpush1.msra.mxu0 0.0
    %302 = vmatprep.subr.mxu0 0.0
    %303 = vmatpush1.msra.mxu0 0.0
    %304 = vmatprep.subr.mxu0 0.0
    %305 = vmatpush1.msra.mxu0 0.0
    %306 = vmatprep.subr.mxu0 0.0
    %307 = vmatpush1.msra.mxu0 0.0
    %308 = vmatprep.subr.mxu0 0.0
    %309 = vmatpush1.msra.mxu0 0.0
    %310 = vmatprep.subr.mxu0 0.0
    %311 = vmatpush1.msra.mxu0 0.0
    %312 = vmatprep.subr.mxu0 0.0
    %313 = vmatpush1.msra.mxu0 0.0
    %314 = vmatprep.subr.mxu0 0.0
    %315 = vmatpush1.msra.mxu0 0.0
    %316 = vmatprep.subr.mxu0 0.0
    %317 = vmatpush1.msra.mxu0 0.0
    %318 = vmatprep.subr.mxu0 0.0
    %319 = vmatpush1.msra.mxu0 0.0
    %320 = vmatprep.mubr.f32.mxu0 0.0
    %321 = vmatmul.mubr.f32.gmra.mrb[0].mxu0 %v254
    %v322 = vpop.f32.mrb[0].mxu0
    %v323 = vadd.f32 %v250, %v322
    %v324 = vpop.f32.mrb[0].mxu0
    %325 = vdwg.mxu0
    %v326 = vld [vmem:[#allocation8] sm:$0xff]
    %v327 = vld [vmem:[#allocation8 + $0x8] sm:$0xff]
    %v328 = vld [vmem:[%s7] sm:$0xff]
    %v329 = vld [vmem:[%s7 + $0x8] sm:$0xff]
    %v330 = vld [vmem:[%s7 + $0x10] sm:$0xff]
    %v331 = vld [vmem:[%s7 + $0x18] sm:$0xff]
    %v333 = vsel %vm252, %v326, 0
    %v336 = vsel %vm252, %v327, 0
    %338 = vmatprep.subr.mxu0 0.0
    %339 = vmatpush1.msra.mxu0 %v328
    %340 = vmatprep.subr.mxu0 0.0
    %341 = vmatpush1.msra.mxu0 %v329
    %342 = vmatprep.subr.mxu0 0.0
    %343 = vmatpush1.msra.mxu0 %v330
    %344 = vmatprep.subr.mxu0 0.0
    %345 = vmatpush1.msra.mxu0 %v331
    %346 = vmatprep.subr.mxu0 0.0
    %347 = vmatpush1.msra.mxu0 0.0
    %348 = vmatprep.subr.mxu0 0.0
    %349 = vmatpush1.msra.mxu0 0.0
    %350 = vmatprep.subr.mxu0 0.0
    %351 = vmatpush1.msra.mxu0 0.0
    %352 = vmatprep.subr.mxu0 0.0
    %353 = vmatpush1.msra.mxu0 0.0
    %354 = vmatprep.subr.mxu0 0.0
    %355 = vmatpush1.msra.mxu0 0.0
    %356 = vmatprep.subr.mxu0 0.0
    %357 = vmatpush1.msra.mxu0 0.0
    %358 = vmatprep.subr.mxu0 0.0
    %359 = vmatpush1.msra.mxu0 0.0
    %360 = vmatprep.subr.mxu0 0.0
    %361 = vmatpush1.msra.mxu0 0.0
    %362 = vmatprep.subr.mxu0 0.0
    %363 = vmatpush1.msra.mxu0 0.0
    %364 = vmatprep.subr.mxu0 0.0
    %365 = vmatpush1.msra.mxu0 0.0
    %366 = vmatprep.subr.mxu0 0.0
    %367 = vmatpush1.msra.mxu0 0.0
    %368 = vmatprep.subr.mxu0 0.0
    %369 = vmatpush1.msra.mxu0 0.0
    %370 = vmatprep.subr.mxu0 0.0
    %371 = vmatpush1.msra.mxu0 0.0
    %372 = vmatprep.subr.mxu0 0.0
    %373 = vmatpush1.msra.mxu0 0.0
    %374 = vmatprep.subr.mxu0 0.0
    %375 = vmatpush1.msra.mxu0 0.0
    %376 = vmatprep.subr.mxu0 0.0
    %377 = vmatpush1.msra.mxu0 0.0
    %378 = vmatprep.subr.mxu0 0.0
    %379 = vmatpush1.msra.mxu0 0.0
    %380 = vmatprep.subr.mxu0 0.0
    %381 = vmatpush1.msra.mxu0 0.0
    %382 = vmatprep.subr.mxu0 0.0
    %383 = vmatpush1.msra.mxu0 0.0
    %384 = vmatprep.subr.mxu0 0.0
    %385 = vmatpush1.msra.mxu0 0.0
    %386 = vmatprep.subr.mxu0 0.0
    %387 = vmatpush1.msra.mxu0 0.0
    %388 = vmatprep.subr.mxu0 0.0
    %389 = vmatpush1.msra.mxu0 0.0
    %390 = vmatprep.subr.mxu0 0.0
    %391 = vmatpush1.msra.mxu0 0.0
    %392 = vmatprep.subr.mxu0 0.0
    %393 = vmatpush1.msra.mxu0 0.0
    %394 = vmatprep.subr.mxu0 0.0
    %395 = vmatpush1.msra.mxu0 0.0
    %396 = vmatprep.subr.mxu0 0.0
    %397 = vmatpush1.msra.mxu0 0.0
    %398 = vmatprep.subr.mxu0 0.0
    %399 = vmatpush1.msra.mxu0 0.0
    %400 = vmatprep.subr.mxu0 0.0
    %401 = vmatpush1.msra.mxu0 0.0
    %402 = vmatprep.mubr.f32.mxu0 0.0
    %403 = vmatmul.mubr.f32.gmra.mrb[0].mxu0 %v333
    %v404 = vpop.f32.mrb[0].mxu0
    %v405 = vadd.f32 0.0, %v404
    %v406 = vpop.f32.mrb[0].mxu0
    %407 = vmatprep.mubr.f32.mxu0 0.0
    %408 = vmatmul.mubr.f32.gmra.mrb[0].mxu0 %v336
    %v409 = vpop.f32.mrb[0].mxu0
    %v410 = vadd.f32 0.0, %v409
    %v411 = vpop.f32.mrb[0].mxu0
    %412 = vdwg.mxu0
    %v415 = vunpack.c.l.s4 1966171168
    %v416 = vunpack.c.0.s8 %v415
    %v417 = vlaneseq
    %v418 = vshrl.u32 %v417, 7
    %v419 = vsub.s32 %v416, %v418
    %v420 = vrot.slane %v323, %v419
    %v421 = vcombine.high %v420, %v420
    %v423 = vunpack.c.l.s4 1966171168
    %v424 = vunpack.c.0.s8 %v423
    %v425 = vlaneseq
    %v426 = vshrl.u32 %v425, 7
    %v427 = vsub.s32 %v424, %v426
    %v428 = vrot.slane %v420, %v427
    %v430 = vunpack.c.l.s4 1966171168
    %v431 = vunpack.c.0.s8 %v430
    %v432 = vlaneseq
    %v433 = vshrl.u32 %v432, 7
    %v434 = vsub.s32 %v431, %v433
    %v435 = vrot.slane %v421, %v434
    %v436 = vlaneseq
    %v437 = vshrl.u32 %v436, 7
    %v438 = vsub.s32 0, %v437
    %v439 = vrot.slane %v428, %v438
    %v440 = vlaneseq
    %v441 = vshrl.u32 %v440, 7
    %v442 = vsub.s32 0, %v441
    %v443 = vrot.slane %v435, %v442
    %v446 = vadd.f32 %v405, %v439
    %v447 = vadd.f32 %v410, %v443
    %v448 = vtanh.pop %v446
    %v449 = vtanh.pop %v447
    %v450 = vld [vmem:[#allocation13] sm:$0x1]
    %v452 = vlaneseq
    %v453 = vshrl.u32 %v452, 7
    %v454 = vsub.s32 0, %v453
    %v455 = vrot.slane %v450, %v454
    %v457 = vmul.f32 %v448, %v455
    %v458 = vmul.f32 %v449, %v455
    %v459 = vsel %vm252, %v457, 0.0
    %460 = vadd.xlane.f32.xlu0 %v459
    %v461 = vpop.xlane.xlu0 %460
    %v462 = vsel %vm252, %v458, 0.0
    %463 = vadd.xlane.f32.xlu0 %v462
    %v464 = vpop.xlane.xlu0 %463
    %v465 = vlaneseq
    %v466 = vand.u32 %v465, 127
    %v467 = vld [vmem:[%s5] sm:$0x3]
    %468 = vset.pattern.permute.xlu0 0
    %469 = vperm.xlu0 %468, %v467
    %v470 = vpop.permute.xlu0 %469
    %vm471 = vcmp.lt.s32.totalorder %v466, %v470
    %v474 = vlaneseq
    %v475 = vshrl.u32 %v474, 7
    %v476 = vsub.s32 %v466, %v475
    %v477 = vrot.slane %v461, %v476
    %v478 = vlaneseq
    %v479 = vshrl.u32 %v478, 7
    %v480 = vsub.s32 %v466, %v479
    %v481 = vrot.slane %v464, %v480
    %vm482 = vcmask 1041409
    %v483 = vsel %vm482, %v481, %v477
    %v485 = vsel %vm471, %v483, -1e+10
    %vm486 = vcmask 58368
    %v487 = vsel %vm486, %v485, -inf
    %488 = vmax.xlane.f32.xlu0 %v487
    %v489 = vpop.xlane.xlu0 %488
    %v490 = vsub.f32 %v485, %v489
    %v491 = vmul.f32 %v490, 1.442695
    %v492 = vpow.pop %v491
    %v493 = vsel %vm486, %v492, 0.0
    %494 = vadd.xlane.f32.xlu0 %v493
    %v495 = vpop.xlane.xlu0 %494
    %v496 = vrcp.pop %v495
    %v497 = vmul.f32 %v492, %v496
    %498 = vst.msk [vmem:[#allocation23] sm:$0x3] %vm486, %v497
    %v501 = vunpack.c.l.s4 1966171168
    %v502 = vunpack.c.0.s8 %v501
    %v503 = vlaneseq
    %v504 = vshrl.u32 %v503, 7
    %v505 = vsub.s32 %v502, %v504
    %v506 = vrot.slane %v497, %v505
    %v507 = vcombine.high %v506, %v506
    %v509 = vunpack.c.l.s4 1966171168
    %v510 = vunpack.c.0.s8 %v509
    %v511 = vlaneseq
    %v512 = vshrl.u32 %v511, 7
    %v513 = vsub.s32 %v510, %v512
    %v514 = vrot.slane %v506, %v513
    %v516 = vunpack.c.l.s4 1966171168
    %v517 = vunpack.c.0.s8 %v516
    %v518 = vlaneseq
    %v519 = vshrl.u32 %v518, 7
    %v520 = vsub.s32 %v517, %v519
    %v521 = vrot.slane %v507, %v520
    %v522 = vld [vmem:[#allocation8] sm:$0xff]
    %v523 = vld [vmem:[#allocation8 + $0x8] sm:$0xff]
    %vm524 = vcmask 64512
    %v525 = vsel %vm524, %v514, 0
    %527 = vmatprep.subr.mxu0 0.0
    %528 = vmatpush1.msra.mxu0 %v522
    %529 = vmatprep.subr.mxu0 0.0
    %530 = vmatpush1.msra.mxu0 0.0
    %531 = vmatprep.subr.mxu0 0.0
    %532 = vmatpush1.msra.mxu0 0.0
    %533 = vmatprep.subr.mxu0 0.0
    %534 = vmatpush1.msra.mxu0 0.0
    %535 = vmatprep.subr.mxu0 0.0
    %536 = vmatpush1.msra.mxu0 0.0
    %537 = vmatprep.subr.mxu0 0.0
    %538 = vmatpush1.msra.mxu0 0.0
    %539 = vmatprep.subr.mxu0 0.0
    %540 = vmatpush1.msra.mxu0 0.0
    %541 = vmatprep.subr.mxu0 0.0
    %542 = vmatpush1.msra.mxu0 0.0
    %543 = vmatprep.subr.mxu0 0.0
    %544 = vmatpush1.msra.mxu0 0.0
    %545 = vmatprep.subr.mxu0 0.0
    %546 = vmatpush1.msra.mxu0 0.0
    %547 = vmatprep.subr.mxu0 0.0
    %548 = vmatpush1.msra.mxu0 0.0
    %549 = vmatprep.subr.mxu0 0.0
    %550 = vmatpush1.msra.mxu0 0.0
    %551 = vmatprep.subr.mxu0 0.0
    %552 = vmatpush1.msra.mxu0 0.0
    %553 = vmatprep.subr.mxu0 0.0
    %554 = vmatpush1.msra.mxu0 0.0
    %555 = vmatprep.subr.mxu0 0.0
    %556 = vmatpush1.msra.mxu0 0.0
    %557 = vmatprep.subr.mxu0 0.0
    %558 = vmatpush1.msra.mxu0 0.0
    %559 = vmatprep.subr.mxu0 0.0
    %560 = vmatpush1.msra.mxu0 0.0
    %561 = vmatprep.subr.mxu0 0.0
    %562 = vmatpush1.msra.mxu0 0.0
    %563 = vmatprep.subr.mxu0 0.0
    %564 = vmatpush1.msra.mxu0 0.0
    %565 = vmatprep.subr.mxu0 0.0
    %566 = vmatpush1.msra.mxu0 0.0
    %567 = vmatprep.subr.mxu0 0.0
    %568 = vmatpush1.msra.mxu0 0.0
    %569 = vmatprep.subr.mxu0 0.0
    %570 = vmatpush1.msra.mxu0 0.0
    %571 = vmatprep.subr.mxu0 0.0
    %572 = vmatpush1.msra.mxu0 0.0
    %573 = vmatprep.subr.mxu0 0.0
    %574 = vmatpush1.msra.mxu0 0.0
    %575 = vmatprep.subr.mxu0 0.0
    %576 = vmatpush1.msra.mxu0 0.0
    %577 = vmatprep.subr.mxu0 0.0
    %578 = vmatpush1.msra.mxu0 0.0
    %579 = vmatprep.subr.mxu0 0.0
    %580 = vmatpush1.msra.mxu0 0.0
    %581 = vmatprep.subr.mxu0 0.0
    %582 = vmatpush1.msra.mxu0 0.0
    %583 = vmatprep.subr.mxu0 0.0
    %584 = vmatpush1.msra.mxu0 0.0
    %585 = vmatprep.subr.mxu0 0.0
    %586 = vmatpush1.msra.mxu0 0.0
    %587 = vmatprep.subr.mxu0 0.0
    %588 = vmatpush1.msra.mxu0 0.0
    %589 = vmatprep.subr.mxu0 0.0
    %590 = vmatpush1.msra.mxu0 0.0
    %591 = vmatprep.mubr.f32.mxu0 0.0
    %592 = vmatmul.mubr.f32.gmra.mrb[0].mxu0 %v525
    %v593 = vpop.f32.mrb[0].mxu0
    %v594 = vadd.f32 0.0, %v593
    %v595 = vpop.f32.mrb[0].mxu0
    %596 = vdwg.mxu0
    %v597 = vsel %vm524, %v521, 0
    %599 = vmatprep.subr.mxu0 0.0
    %600 = vmatpush1.msra.mxu0 %v523
    %601 = vmatprep.subr.mxu0 0.0
    %602 = vmatpush1.msra.mxu0 0.0
    %603 = vmatprep.subr.mxu0 0.0
    %604 = vmatpush1.msra.mxu0 0.0
    %605 = vmatprep.subr.mxu0 0.0
    %606 = vmatpush1.msra.mxu0 0.0
    %607 = vmatprep.subr.mxu0 0.0
    %608 = vmatpush1.msra.mxu0 0.0
    %609 = vmatprep.subr.mxu0 0.0
    %610 = vmatpush1.msra.mxu0 0.0
    %611 = vmatprep.subr.mxu0 0.0
    %612 = vmatpush1.msra.mxu0 0.0
    %613 = vmatprep.subr.mxu0 0.0
    %614 = vmatpush1.msra.mxu0 0.0
    %615 = vmatprep.subr.mxu0 0.0
    %616 = vmatpush1.msra.mxu0 0.0
    %617 = vmatprep.subr.mxu0 0.0
    %618 = vmatpush1.msra.mxu0 0.0
    %619 = vmatprep.subr.mxu0 0.0
    %620 = vmatpush1.msra.mxu0 0.0
    %621 = vmatprep.subr.mxu0 0.0
    %622 = vmatpush1.msra.mxu0 0.0
    %623 = vmatprep.subr.mxu0 0.0
    %624 = vmatpush1.msra.mxu0 0.0
    %625 = vmatprep.subr.mxu0 0.0
    %626 = vmatpush1.msra.mxu0 0.0
    %627 = vmatprep.subr.mxu0 0.0
    %628 = vmatpush1.msra.mxu0 0.0
    %629 = vmatprep.subr.mxu0 0.0
    %630 = vmatpush1.msra.mxu0 0.0
    %631 = vmatprep.subr.mxu0 0.0
    %632 = vmatpush1.msra.mxu0 0.0
    %633 = vmatprep.subr.mxu0 0.0
    %634 = vmatpush1.msra.mxu0 0.0
    %635 = vmatprep.subr.mxu0 0.0
    %636 = vmatpush1.msra.mxu0 0.0
    %637 = vmatprep.subr.mxu0 0.0
    %638 = vmatpush1.msra.mxu0 0.0
    %639 = vmatprep.subr.mxu0 0.0
    %640 = vmatpush1.msra.mxu0 0.0
    %641 = vmatprep.subr.mxu0 0.0
    %642 = vmatpush1.msra.mxu0 0.0
    %643 = vmatprep.subr.mxu0 0.0
    %644 = vmatpush1.msra.mxu0 0.0
    %645 = vmatprep.subr.mxu0 0.0
    %646 = vmatpush1.msra.mxu0 0.0
    %647 = vmatprep.subr.mxu0 0.0
    %648 = vmatpush1.msra.mxu0 0.0
    %649 = vmatprep.subr.mxu0 0.0
    %650 = vmatpush1.msra.mxu0 0.0
    %651 = vmatprep.subr.mxu0 0.0
    %652 = vmatpush1.msra.mxu0 0.0
    %653 = vmatprep.subr.mxu0 0.0
    %654 = vmatpush1.msra.mxu0 0.0
    %655 = vmatprep.subr.mxu0 0.0
    %656 = vmatpush1.msra.mxu0 0.0
    %657 = vmatprep.subr.mxu0 0.0
    %658 = vmatpush1.msra.mxu0 0.0
    %659 = vmatprep.subr.mxu0 0.0
    %660 = vmatpush1.msra.mxu0 0.0
    %661 = vmatprep.subr.mxu0 0.0
    %662 = vmatpush1.msra.mxu0 0.0
    %663 = vmatprep.mubr.f32.mxu0 0.0
    %664 = vmatmul.mubr.f32.gmra.mrb[0].mxu0 %v597
    %v665 = vpop.f32.mrb[0].mxu0
    %v666 = vadd.f32 0.0, %v665
    %v667 = vpop.f32.mrb[0].mxu0
    %668 = vdwg.mxu0
    %v669 = vld [vmem:[#allocation14] sm:$0xff]
    %v670 = vld [vmem:[#allocation14 + $0x8] sm:$0xff]
    %v671 = vld [vmem:[#allocation14 + $0x10] sm:$0xff]
    %v672 = vld [vmem:[#allocation14 + $0x18] sm:$0xff]
    %v673 = vld [vmem:[#allocation16] sm:$0x1]
    %v675 = vlaneseq
    %v676 = vshrl.u32 %v675, 7
    %v677 = vsub.s32 0, %v676
    %v678 = vrot.slane %v673, %v677
    %v682 = vrot.slane %v666, 7
    %v683 = vsel %vm482, %v682, %v594
    %v684 = vsel %vm252, %v683, 0
    %686 = vmatprep.subr.mxu0 0.0
    %687 = vmatpush1.msra.mxu0 %v669
    %688 = vmatprep.subr.mxu0 0.0
    %689 = vmatpush1.msra.mxu0 %v670
    %690 = vmatprep.subr.mxu0 0.0
    %691 = vmatpush1.msra.mxu0 %v671
    %692 = vmatprep.subr.mxu0 0.0
    %693 = vmatpush1.msra.mxu0 %v672
    %694 = vmatprep.subr.mxu0 0.0
    %695 = vmatpush1.msra.mxu0 0.0
    %696 = vmatprep.subr.mxu0 0.0
    %697 = vmatpush1.msra.mxu0 0.0
    %698 = vmatprep.subr.mxu0 0.0
    %699 = vmatpush1.msra.mxu0 0.0
    %700 = vmatprep.subr.mxu0 0.0
    %701 = vmatpush1.msra.mxu0 0.0
    %702 = vmatprep.subr.mxu0 0.0
    %703 = vmatpush1.msra.mxu0 0.0
    %704 = vmatprep.subr.mxu0 0.0
    %705 = vmatpush1.msra.mxu0 0.0
    %706 = vmatprep.subr.mxu0 0.0
    %707 = vmatpush1.msra.mxu0 0.0
    %708 = vmatprep.subr.mxu0 0.0
    %709 = vmatpush1.msra.mxu0 0.0
    %710 = vmatprep.subr.mxu0 0.0
    %711 = vmatpush1.msra.mxu0 0.0
    %712 = vmatprep.subr.mxu0 0.0
    %713 = vmatpush1.msra.mxu0 0.0
    %714 = vmatprep.subr.mxu0 0.0
    %715 = vmatpush1.msra.mxu0 0.0
    %716 = vmatprep.subr.mxu0 0.0
    %717 = vmatpush1.msra.mxu0 0.0
    %718 = vmatprep.subr.mxu0 0.0
    %719 = vmatpush1.msra.mxu0 0.0
    %720 = vmatprep.subr.mxu0 0.0
    %721 = vmatpush1.msra.mxu0 0.0
    %722 = vmatprep.subr.mxu0 0.0
    %723 = vmatpush1.msra.mxu0 0.0
    %724 = vmatprep.subr.mxu0 0.0
    %725 = vmatpush1.msra.mxu0 0.0
    %726 = vmatprep.subr.mxu0 0.0
    %727 = vmatpush1.msra.mxu0 0.0
    %728 = vmatprep.subr.mxu0 0.0
    %729 = vmatpush1.msra.mxu0 0.0
    %730 = vmatprep.subr.mxu0 0.0
    %731 = vmatpush1.msra.mxu0 0.0
    %732 = vmatprep.subr.mxu0 0.0
    %733 = vmatpush1.msra.mxu0 0.0
    %734 = vmatprep.subr.mxu0 0.0
    %735 = vmatpush1.msra.mxu0 0.0
    %736 = vmatprep.subr.mxu0 0.0
    %737 = vmatpush1.msra.mxu0 0.0
    %738 = vmatprep.subr.mxu0 0.0
    %739 = vmatpush1.msra.mxu0 0.0
    %740 = vmatprep.subr.mxu0 0.0
    %741 = vmatpush1.msra.mxu0 0.0
    %742 = vmatprep.subr.mxu0 0.0
    %743 = vmatpush1.msra.mxu0 0.0
    %744 = vmatprep.subr.mxu0 0.0
    %745 = vmatpush1.msra.mxu0 0.0
    %746 = vmatprep.subr.mxu0 0.0
    %747 = vmatpush1.msra.mxu0 0.0
    %748 = vmatprep.subr.mxu0 0.0
    %749 = vmatpush1.msra.mxu0 0.0
    %750 = vmatprep.mubr.f32.mxu0 0.0
    %751 = vmatmul.mubr.f32.gmra.mrb[0].mxu0 %v684
    %v752 = vpop.f32.mrb[0].mxu0
    %v753 = vadd.f32 %v678, %v752
    %v754 = vpop.f32.mrb[0].mxu0
    %755 = vdwg.mxu0
    %v756 = vld [vmem:[#allocation17] sm:$0xff]
    %v757 = vld [vmem:[#allocation17 + $0x8] sm:$0xff]
    %v758 = vld [vmem:[#allocation17 + $0x10] sm:$0xff]
    %v759 = vld [vmem:[#allocation17 + $0x18] sm:$0xff]
    %v760 = vld [vmem:[#allocation19] sm:$0xff]
    %v761 = vld [vmem:[#allocation19 + $0x8] sm:$0xff]
    %v762 = vld [vmem:[#allocation19 + $0x10] sm:$0xff]
    %v763 = vld [vmem:[#allocation19 + $0x18] sm:$0xff]
    %v765 = vsel %vm252, %v753, 0
    %767 = vmatprep.subr.mxu0 0.0
    %768 = vmatpush1.msra.mxu0 %v760
    %769 = vmatprep.subr.mxu0 0.0
    %770 = vmatpush1.msra.mxu0 %v761
    %771 = vmatprep.subr.mxu0 0.0
    %772 = vmatpush1.msra.mxu0 %v762
    %773 = vmatprep.subr.mxu0 0.0
    %774 = vmatpush1.msra.mxu0 %v763
    %775 = vmatprep.subr.mxu0 0.0
    %776 = vmatpush1.msra.mxu0 0.0
    %777 = vmatprep.subr.mxu0 0.0
    %778 = vmatpush1.msra.mxu0 0.0
    %779 = vmatprep.subr.mxu0 0.0
    %780 = vmatpush1.msra.mxu0 0.0
    %781 = vmatprep.subr.mxu0 0.0
    %782 = vmatpush1.msra.mxu0 0.0
    %783 = vmatprep.subr.mxu0 0.0
    %784 = vmatpush1.msra.mxu0 0.0
    %785 = vmatprep.subr.mxu0 0.0
    %786 = vmatpush1.msra.mxu0 0.0
    %787 = vmatprep.subr.mxu0 0.0
    %788 = vmatpush1.msra.mxu0 0.0
    %789 = vmatprep.subr.mxu0 0.0
    %790 = vmatpush1.msra.mxu0 0.0
    %791 = vmatprep.subr.mxu0 0.0
    %792 = vmatpush1.msra.mxu0 0.0
    %793 = vmatprep.subr.mxu0 0.0
    %794 = vmatpush1.msra.mxu0 0.0
    %795 = vmatprep.subr.mxu0 0.0
    %796 = vmatpush1.msra.mxu0 0.0
    %797 = vmatprep.subr.mxu0 0.0
    %798 = vmatpush1.msra.mxu0 0.0
    %799 = vmatprep.subr.mxu0 0.0
    %800 = vmatpush1.msra.mxu0 0.0
    %801 = vmatprep.subr.mxu0 0.0
    %802 = vmatpush1.msra.mxu0 0.0
    %803 = vmatprep.subr.mxu0 0.0
    %804 = vmatpush1.msra.mxu0 0.0
    %805 = vmatprep.subr.mxu0 0.0
    %806 = vmatpush1.msra.mxu0 0.0
    %807 = vmatprep.subr.mxu0 0.0
    %808 = vmatpush1.msra.mxu0 0.0
    %809 = vmatprep.subr.mxu0 0.0
    %810 = vmatpush1.msra.mxu0 0.0
    %811 = vmatprep.subr.mxu0 0.0
    %812 = vmatpush1.msra.mxu0 0.0
    %813 = vmatprep.subr.mxu0 0.0
    %814 = vmatpush1.msra.mxu0 0.0
    %815 = vmatprep.subr.mxu0 0.0
    %816 = vmatpush1.msra.mxu0 0.0
    %817 = vmatprep.subr.mxu0 0.0
    %818 = vmatpush1.msra.mxu0 0.0
    %819 = vmatprep.subr.mxu0 0.0
    %820 = vmatpush1.msra.mxu0 0.0
    %821 = vmatprep.subr.mxu0 0.0
    %822 = vmatpush1.msra.mxu0 0.0
    %823 = vmatprep.subr.mxu0 0.0
    %824 = vmatpush1.msra.mxu0 0.0
    %825 = vmatprep.subr.mxu0 0.0
    %826 = vmatpush1.msra.mxu0 0.0
    %827 = vmatprep.subr.mxu0 0.0
    %828 = vmatpush1.msra.mxu0 0.0
    %829 = vmatprep.subr.mxu0 0.0
    %830 = vmatpush1.msra.mxu0 0.0
    %831 = vmatprep.mubr.f32.mxu0 0.0
    %832 = vmatmul.mubr.f32.gmra.mrb[0].mxu0 %v765
    %v833 = vpop.f32.mrb[0].mxu0
    %v834 = vadd.f32 0.0, %v833
    %v835 = vpop.f32.mrb[0].mxu0
    %836 = vdwg.mxu0
    %v838 = vsel %vm252, %v214, 0
    %840 = vmatprep.subr.mxu0 0.0
    %841 = vmatpush1.msra.mxu0 %v756
    %842 = vmatprep.subr.mxu0 0.0
    %843 = vmatpush1.msra.mxu0 %v757
    %844 = vmatprep.subr.mxu0 0.0
    %845 = vmatpush1.msra.mxu0 %v758
    %846 = vmatprep.subr.mxu0 0.0
    %847 = vmatpush1.msra.mxu0 %v759
    %848 = vmatprep.subr.mxu0 0.0
    %849 = vmatpush1.msra.mxu0 0.0
    %850 = vmatprep.subr.mxu0 0.0
    %851 = vmatpush1.msra.mxu0 0.0
    %852 = vmatprep.subr.mxu0 0.0
    %853 = vmatpush1.msra.mxu0 0.0
    %854 = vmatprep.subr.mxu0 0.0
    %855 = vmatpush1.msra.mxu0 0.0
    %856 = vmatprep.subr.mxu0 0.0
    %857 = vmatpush1.msra.mxu0 0.0
    %858 = vmatprep.subr.mxu0 0.0
    %859 = vmatpush1.msra.mxu0 0.0
    %860 = vmatprep.subr.mxu0 0.0
    %861 = vmatpush1.msra.mxu0 0.0
    %862 = vmatprep.subr.mxu0 0.0
    %863 = vmatpush1.msra.mxu0 0.0
    %864 = vmatprep.subr.mxu0 0.0
    %865 = vmatpush1.msra.mxu0 0.0
    %866 = vmatprep.subr.mxu0 0.0
    %867 = vmatpush1.msra.mxu0 0.0
    %868 = vmatprep.subr.mxu0 0.0
    %869 = vmatpush1.msra.mxu0 0.0
    %870 = vmatprep.subr.mxu0 0.0
    %871 = vmatpush1.msra.mxu0 0.0
    %872 = vmatprep.subr.mxu0 0.0
    %873 = vmatpush1.msra.mxu0 0.0
    %874 = vmatprep.subr.mxu0 0.0
    %875 = vmatpush1.msra.mxu0 0.0
    %876 = vmatprep.subr.mxu0 0.0
    %877 = vmatpush1.msra.mxu0 0.0
    %878 = vmatprep.subr.mxu0 0.0
    %879 = vmatpush1.msra.mxu0 0.0
    %880 = vmatprep.subr.mxu0 0.0
    %881 = vmatpush1.msra.mxu0 0.0
    %882 = vmatprep.subr.mxu0 0.0
    %883 = vmatpush1.msra.mxu0 0.0
    %884 = vmatprep.subr.mxu0 0.0
    %885 = vmatpush1.msra.mxu0 0.0
    %886 = vmatprep.subr.mxu0 0.0
    %887 = vmatpush1.msra.mxu0 0.0
    %888 = vmatprep.subr.mxu0 0.0
    %889 = vmatpush1.msra.mxu0 0.0
    %890 = vmatprep.subr.mxu0 0.0
    %891 = vmatpush1.msra.mxu0 0.0
    %892 = vmatprep.subr.mxu0 0.0
    %893 = vmatpush1.msra.mxu0 0.0
    %894 = vmatprep.subr.mxu0 0.0
    %895 = vmatpush1.msra.mxu0 0.0
    %896 = vmatprep.subr.mxu0 0.0
    %897 = vmatpush1.msra.mxu0 0.0
    %898 = vmatprep.subr.mxu0 0.0
    %899 = vmatpush1.msra.mxu0 0.0
    %900 = vmatprep.subr.mxu0 0.0
    %901 = vmatpush1.msra.mxu0 0.0
    %902 = vmatprep.subr.mxu0 0.0
    %903 = vmatpush1.msra.mxu0 0.0
    %904 = vmatprep.mubr.f32.mxu0 0.0
    %905 = vmatmul.mubr.f32.gmra.mrb[0].mxu0 %v838
    %v906 = vpop.f32.mrb[0].mxu0
    %v907 = vadd.f32 %v834, %v906
    %v908 = vpop.f32.mrb[0].mxu0
    %909 = vdwg.mxu0
    %v910 = vld [vmem:[#allocation20] sm:$0xff]
    %v911 = vld [vmem:[#allocation20 + $0x8] sm:$0xff]
    %v912 = vld [vmem:[#allocation20 + $0x10] sm:$0xff]
    %v913 = vld [vmem:[#allocation20 + $0x18] sm:$0xff]
    %v915 = vsel %vm252, %v239, 0
    %917 = vmatprep.subr.mxu0 0.0
    %918 = vmatpush1.msra.mxu0 %v910
    %919 = vmatprep.subr.mxu0 0.0
    %920 = vmatpush1.msra.mxu0 %v911
    %921 = vmatprep.subr.mxu0 0.0
    %922 = vmatpush1.msra.mxu0 %v912
    %923 = vmatprep.subr.mxu0 0.0
    %924 = vmatpush1.msra.mxu0 %v913
    %925 = vmatprep.subr.mxu0 0.0
    %926 = vmatpush1.msra.mxu0 0.0
    %927 = vmatprep.subr.mxu0 0.0
    %928 = vmatpush1.msra.mxu0 0.0
    %929 = vmatprep.subr.mxu0 0.0
    %930 = vmatpush1.msra.mxu0 0.0
    %931 = vmatprep.subr.mxu0 0.0
    %932 = vmatpush1.msra.mxu0 0.0
    %933 = vmatprep.subr.mxu0 0.0
    %934 = vmatpush1.msra.mxu0 0.0
    %935 = vmatprep.subr.mxu0 0.0
    %936 = vmatpush1.msra.mxu0 0.0
    %937 = vmatprep.subr.mxu0 0.0
    %938 = vmatpush1.msra.mxu0 0.0
    %939 = vmatprep.subr.mxu0 0.0
    %940 = vmatpush1.msra.mxu0 0.0
    %941 = vmatprep.subr.mxu0 0.0
    %942 = vmatpush1.msra.mxu0 0.0
    %943 = vmatprep.subr.mxu0 0.0
    %944 = vmatpush1.msra.mxu0 0.0
    %945 = vmatprep.subr.mxu0 0.0
    %946 = vmatpush1.msra.mxu0 0.0
    %947 = vmatprep.subr.mxu0 0.0
    %948 = vmatpush1.msra.mxu0 0.0
    %949 = vmatprep.subr.mxu0 0.0
    %950 = vmatpush1.msra.mxu0 0.0
    %951 = vmatprep.subr.mxu0 0.0
    %952 = vmatpush1.msra.mxu0 0.0
    %953 = vmatprep.subr.mxu0 0.0
    %954 = vmatpush1.msra.mxu0 0.0
    %955 = vmatprep.subr.mxu0 0.0
    %956 = vmatpush1.msra.mxu0 0.0
    %957 = vmatprep.subr.mxu0 0.0
    %958 = vmatpush1.msra.mxu0 0.0
    %959 = vmatprep.subr.mxu0 0.0
    %960 = vmatpush1.msra.mxu0 0.0
    %961 = vmatprep.subr.mxu0 0.0
    %962 = vmatpush1.msra.mxu0 0.0
    %963 = vmatprep.subr.mxu0 0.0
    %964 = vmatpush1.msra.mxu0 0.0
    %965 = vmatprep.subr.mxu0 0.0
    %966 = vmatpush1.msra.mxu0 0.0
    %967 = vmatprep.subr.mxu0 0.0
    %968 = vmatpush1.msra.mxu0 0.0
    %969 = vmatprep.subr.mxu0 0.0
    %970 = vmatpush1.msra.mxu0 0.0
    %971 = vmatprep.subr.mxu0 0.0
    %972 = vmatpush1.msra.mxu0 0.0
    %973 = vmatprep.subr.mxu0 0.0
    %974 = vmatpush1.msra.mxu0 0.0
    %975 = vmatprep.subr.mxu0 0.0
    %976 = vmatpush1.msra.mxu0 0.0
    %977 = vmatprep.subr.mxu0 0.0
    %978 = vmatpush1.msra.mxu0 0.0
    %979 = vmatprep.subr.mxu0 0.0
    %980 = vmatpush1.msra.mxu0 0.0
    %981 = vmatprep.mubr.f32.mxu0 0.0
    %982 = vmatmul.mubr.f32.gmra.mrb[0].mxu0 %v915
    %v983 = vpop.f32.mrb[0].mxu0
    %v984 = vadd.f32 0.0, %v983
    %v985 = vpop.f32.mrb[0].mxu0
    %986 = vdwg.mxu0
    %v987 = vadd.f32 %v907, %v984
    %v988 = vld [vmem:[%s16] sm:$0x1]
    %v990 = vlaneseq
    %v991 = vshrl.u32 %v990, 7
    %v992 = vsub.s32 0, %v991
    %v993 = vrot.slane %v988, %v992
    %v995 = vadd.f32 %v987, %v993
    %v996 = vld [vmem:[%s15] sm:$0xff]
    %v997 = vld [vmem:[%s15 + $0x8] sm:$0xff]
    %v998 = vld [vmem:[%s15 + $0x10] sm:$0xff]
    %v999 = vld [vmem:[%s15 + $0x18] sm:$0xff]
    %v1000 = vld [vmem:[%s17] sm:$0x1]
    %v1002 = vlaneseq
    %v1003 = vshrl.u32 %v1002, 7
    %v1004 = vsub.s32 0, %v1003
    %v1005 = vrot.slane %v1000, %v1004
    %1007 = vmatprep.subr.mxu0 0.0
    %1008 = vmatpush1.msra.mxu0 %v996
    %1009 = vmatprep.subr.mxu0 0.0
    %1010 = vmatpush1.msra.mxu0 %v997
    %1011 = vmatprep.subr.mxu0 0.0
    %1012 = vmatpush1.msra.mxu0 %v998
    %1013 = vmatprep.subr.mxu0 0.0
    %1014 = vmatpush1.msra.mxu0 %v999
    %1015 = vmatprep.subr.mxu0 0.0
    %1016 = vmatpush1.msra.mxu0 0.0
    %1017 = vmatprep.subr.mxu0 0.0
    %1018 = vmatpush1.msra.mxu0 0.0
    %1019 = vmatprep.subr.mxu0 0.0
    %1020 = vmatpush1.msra.mxu0 0.0
    %1021 = vmatprep.subr.mxu0 0.0
    %1022 = vmatpush1.msra.mxu0 0.0
    %1023 = vmatprep.subr.mxu0 0.0
    %1024 = vmatpush1.msra.mxu0 0.0
    %1025 = vmatprep.subr.mxu0 0.0
    %1026 = vmatpush1.msra.mxu0 0.0
    %1027 = vmatprep.subr.mxu0 0.0
    %1028 = vmatpush1.msra.mxu0 0.0
    %1029 = vmatprep.subr.mxu0 0.0
    %1030 = vmatpush1.msra.mxu0 0.0
    %1031 = vmatprep.subr.mxu0 0.0
    %1032 = vmatpush1.msra.mxu0 0.0
    %1033 = vmatprep.subr.mxu0 0.0
    %1034 = vmatpush1.msra.mxu0 0.0
    %1035 = vmatprep.subr.mxu0 0.0
    %1036 = vmatpush1.msra.mxu0 0.0
    %1037 = vmatprep.subr.mxu0 0.0
    %1038 = vmatpush1.msra.mxu0 0.0
    %1039 = vmatprep.subr.mxu0 0.0
    %1040 = vmatpush1.msra.mxu0 0.0
    %1041 = vmatprep.subr.mxu0 0.0
    %1042 = vmatpush1.msra.mxu0 0.0
    %1043 = vmatprep.subr.mxu0 0.0
    %1044 = vmatpush1.msra.mxu0 0.0
    %1045 = vmatprep.subr.mxu0 0.0
    %1046 = vmatpush1.msra.mxu0 0.0
    %1047 = vmatprep.subr.mxu0 0.0
    %1048 = vmatpush1.msra.mxu0 0.0
    %1049 = vmatprep.subr.mxu0 0.0
    %1050 = vmatpush1.msra.mxu0 0.0
    %1051 = vmatprep.subr.mxu0 0.0
    %1052 = vmatpush1.msra.mxu0 0.0
    %1053 = vmatprep.subr.mxu0 0.0
    %1054 = vmatpush1.msra.mxu0 0.0
    %1055 = vmatprep.subr.mxu0 0.0
    %1056 = vmatpush1.msra.mxu0 0.0
    %1057 = vmatprep.subr.mxu0 0.0
    %1058 = vmatpush1.msra.mxu0 0.0
    %1059 = vmatprep.subr.mxu0 0.0
    %1060 = vmatpush1.msra.mxu0 0.0
    %1061 = vmatprep.subr.mxu0 0.0
    %1062 = vmatpush1.msra.mxu0 0.0
    %1063 = vmatprep.subr.mxu0 0.0
    %1064 = vmatpush1.msra.mxu0 0.0
    %1065 = vmatprep.subr.mxu0 0.0
    %1066 = vmatpush1.msra.mxu0 0.0
    %1067 = vmatprep.subr.mxu0 0.0
    %1068 = vmatpush1.msra.mxu0 0.0
    %1069 = vmatprep.subr.mxu0 0.0
    %1070 = vmatpush1.msra.mxu0 0.0
    %1071 = vmatprep.mubr.f32.mxu0 0.0
    %1072 = vmatmul.mubr.f32.gmra.mrb[0].mxu0 %v254
    %v1073 = vpop.f32.mrb[0].mxu0
    %v1074 = vadd.f32 %v1005, %v1073
    %v1075 = vpop.f32.mrb[0].mxu0
    %1076 = vdwg.mxu0
    %v1077 = vadd.f32 %v995, %v1074
    %v1078 = vxor.u32 %v1077, 2147483648
    %v1079 = vmul.f32 %v1078, 1.442695
    %v1080 = vpow.pop %v1079
    %v1081 = vadd.f32 %v1080, 1.0
    %v1082 = vrcp.pop %v1081
    %v1083 = vmul.f32 1.0, %v1082
    %1085 = vrot.lane.b32.xlu0 %v1074, 64
    %v1086 = vpop.permute.xlu0 %1085
    %v1088 = vmul.f32 %v1083, %v1086
    %1090 = vrot.lane.b32.xlu0 %v1088, 64
    %v1091 = vpop.permute.xlu0 %1090
    %v1093 = vadd.f32 %v995, %v1091
    %v1094 = vtanh.pop %v1093
    %v1095 = vsub.f32 1.0, %v1083
    %1097 = vrot.lane.b32.xlu0 %v1094, 96
    %v1098 = vpop.permute.xlu0 %1097
    %v1100 = vmul.f32 %v1095, %v1098
    %1101 = vrot.lane.b32.xlu0 %v240, 32
    %v1102 = vpop.permute.xlu0 %1101
    %v1104 = vmul.f32 %v1083, %v1102
    %v1105 = vadd.f32 %v1100, %v1104
    %1107 = vrot.lane.b32.xlu0 %v1105, 96
    %v1108 = vpop.permute.xlu0 %1107
    %vm1110 = vcmask 254976
    %1111 = vst.msk [vmem:[#allocation22] sm:$0x3] %vm1110, %v1108
    // Predicated region
    $region122: #{tpu_custom_call.1} parent=1 // pred_check
      _
    $region123: #{tpu_custom_call.1} parent=1 // pred_check_branch
      %1113 = sbr.rel (0) target = $region125
    $region124: #{tpu_custom_call.1} parent=1 // pred_region
      %s1115 = ssub.s32 32, 32
      %1116 = vsyncadd [#allocation4], %s1115
      %s1118 = sshll.u32 [#allocation22], 4
      %s1119 = int_to_ptr.vmem [resolvable:$true] %s1118
      %1121 = dma.vmem_to_hbm [thread:$0]  %s1119, 32, %s18, [#allocation4]
    $region125: #{tpu_custom_call.1} parent=1 // pred_fallthru
      _
    // Predicated region
    $region126: #{tpu_custom_call.1} parent=1 // pred_check
      _
    $region127: #{tpu_custom_call.1} parent=1 // pred_check_branch
      %1123 = sbr.rel (0) target = $region129
    $region128: #{tpu_custom_call.1} parent=1 // pred_region
      %s1125 = ssub.s32 32, 32
      %1126 = vsyncadd [#allocation24], %s1125
      %s1128 = sshll.u32 [#allocation23], 4
      %s1129 = int_to_ptr.vmem [resolvable:$true] %s1128
      %1131 = dma.vmem_to_hbm [thread:$0]  %s1129, 32, %s19, [#allocation24]
    $region129: #{tpu_custom_call.1} parent=1 // pred_fallthru
      _
    // Predicated region
    $region130: #{tpu_custom_call.1} parent=1 // pred_check
      _
    $region131: #{tpu_custom_call.1} parent=1 // pred_check_branch
      %1133 = sbr.rel (0) target = $region133
    $region132: #{tpu_custom_call.1} parent=1 // pred_region
      %1134 = dma.done [#allocation4], 32
    $region133: #{tpu_custom_call.1} parent=1 // pred_fallthru
      _
    // Predicated region
    $region134: #{tpu_custom_call.1} parent=1 // pred_check
      _
    $region135: #{tpu_custom_call.1} parent=1 // pred_check_branch
      %1136 = sbr.rel (0) target = $region137
    $region136: #{tpu_custom_call.1} parent=1 // pred_region
      %1137 = dma.done [#allocation24], 32
    $region137: #{tpu_custom_call.1} parent=1 // pred_fallthru
      _
    %1138 = vsyncpa [#allocation3], 1
    %1139 = vsyncpa [#allocation6], 1
    %1140 = vsyncpa [#allocation9], 1
    %1141 = vsyncpa [#allocation12], 1
    %1142 = vsyncpa [#allocation15], 1
    %1143 = vsyncpa [#allocation18], 1
    %1144 = vsyncpa [#allocation21], 1
    %1145 = vsyncpa [#allocation4], 1
    %1146 = vsyncpa [#allocation24], 1

</llo_original>
